<compile_context>
chip_gen: v5e
topology: v5e:2x2
jax: 0.10.0
libtpu: 0.0.40
codegen_flags: <defaults>
</compile_context>

<pallas_src>
import functools

import jax
import jax.numpy as jnp
from jax.experimental import pallas as pl
from jax.experimental.pallas import tpu as pltpu


# ----------------------------------------------------------------------------
# Fused kernel. refs (all VMEM, no grid):
#   x:        layer-0 input. num_layers>=2: PAIRED time-major flat (T*BP, 2*D)
#             with row block s = [x(time s) | x(time T-1-s)];
#             num_layers==1: plain time-major flat (T*BP, D).
#   per fused layer l (0..L-2): w_ih_pair (2*d_in, 8H) block-diag/interleaved,
#             b_pair (1, 8H) interleaved, w_hh_pack (2H, 8H) block-diag/interl.
#   last layer: w_ih_last (d_in, 8H) = [fwd 4H | bwd 4H] (gate order i,f,g,o),
#             b_last (1, 8H), w_hh_f_last (H, 4H).
#   head:     (w, b) per lin layer, then w_out (prev, 2), b_out (1, 2).
#   out_ref:  (BP, 2)
#   scratch:  xg_scr (T*BP, 8H) f32, seq_scr (T*BP, 2H) f32.
# ----------------------------------------------------------------------------
def _fused_kernel(*refs, num_layers, n_lin, hidden, T, BP):
    H = hidden

    idx = 0
    x_ref = refs[idx]; idx += 1
    fused_p = []
    for _ in range(num_layers - 1):
        fused_p.append(refs[idx:idx + 3]); idx += 3
    w_ih_last_ref, b_last_ref, w_hh_last_ref = refs[idx:idx + 3]; idx += 3
    lin_p = []
    for _ in range(n_lin):
        lin_p.append(refs[idx:idx + 2]); idx += 2
    wo_ref, bo_ref = refs[idx], refs[idx + 1]; idx += 2
    out_ref = refs[idx]; idx += 1
    xg_scr = refs[idx]; idx += 1          # (T*BP, 8H) input-projection staging
    seq_scr = refs[idx]                   # (T*BP, 2H) inter-layer sequence

    # ------------- fused bidirectional layers 0 .. L-2 ----------------------
    for l in range(num_layers - 1):
        w_ih_ref, b_ref, w_hh_ref = fused_p[l]
        if l == 0:
            pin = x_ref[...]                                 # (T*BP, 2*D), paired by wrapper
        else:
            # Middle layers (only for num_layers > 2): build paired input from
            # the previous layer's sequence scratch.
            sv = seq_scr[...]                                # (T*BP, 2H)
            pin = jnp.concatenate(
                [jnp.concatenate([sv[s * BP:(s + 1) * BP, :],
                                  sv[(T - 1 - s) * BP:(T - s) * BP, :]], axis=-1)
                 for s in range(T)], axis=0)                 # (T*BP, 4H)

        # Hoisted input projection for all timesteps + both directions (one
        # wide MXU matmul, bias folded once), staged through VMEM scratch so
        # the unrolled recurrence keeps a tiny vreg live set.
        xg_scr[...] = (jnp.dot(pin, w_ih_ref[...],
                               preferred_element_type=jnp.float32) + b_ref[...])
        w_hh = w_hh_ref[...]                                 # (2H, 8H), hoisted once

        h = None
        c = None
        for s in range(T):
            xg = xg_scr[s * BP:(s + 1) * BP, :]              # (BP, 8H), sliced at use
            if s == 0:
                gates = xg                                   # zero state: skip h@W_hh
            else:
                gates = xg + jnp.dot(h, w_hh, preferred_element_type=jnp.float32)
            sg = jax.nn.sigmoid(gates)                       # full width (i, f, o)
            gg = jnp.tanh(gates[:, 4 * H:6 * H])             # [g_f | g_b]
            i_p = sg[:, 0:2 * H]
            o_p = sg[:, 6 * H:8 * H]
            if s == 0:
                c = i_p * gg                                 # f*c vanishes (c=0)
            else:
                c = sg[:, 2 * H:4 * H] * c + i_p * gg
            h = o_p * jnp.tanh(c)                            # (BP, 2H) = [h_f | h_b]
            # Aligned per-step stores: fwd half -> time s, bwd half -> T-1-s.
            seq_scr[s * BP:(s + 1) * BP, 0:H] = h[:, 0:H]
            seq_scr[(T - 1 - s) * BP:(T - s) * BP, H:2 * H] = h[:, H:2 * H]

    # ------------- last layer: only rnn_output[-1] feeds the head -----------
    last_in = x_ref[...] if num_layers == 1 else seq_scr[...]
    xg_scr[...] = (jnp.dot(last_in, w_ih_last_ref[...],
                           preferred_element_type=jnp.float32) + b_last_ref[...])
    w_hh_f = w_hh_last_ref[...]                              # (H, 4H)

    h = None
    c = None
    for t in range(T):
        xg = xg_scr[t * BP:(t + 1) * BP, 0:4 * H]            # fwd half, one vreg
        if t == 0:
            gates = xg                                       # zero state: skip h@W_hh
        else:
            gates = xg + jnp.dot(h, w_hh_f, preferred_element_type=jnp.float32)
        sg = jax.nn.sigmoid(gates)
        gg = jnp.tanh(gates[:, 2 * H:3 * H])
        if t == 0:
            c = sg[:, 0:H] * gg                              # f*c vanishes
        else:
            c = sg[:, H:2 * H] * c + sg[:, 0:H] * gg
        h = sg[:, 3 * H:4 * H] * jnp.tanh(c)
    h_f_final = h                                            # (BP, H)

    # Backward direction: only its first step (time T-1, zero state) is needed
    # for rnn_output[-1]; h@W_hh and f*c vanish -> a single cell evaluation.
    gates_b = xg_scr[(T - 1) * BP:T * BP, 4 * H:8 * H]
    sgb = jax.nn.sigmoid(gates_b)
    ggb = jnp.tanh(gates_b[:, 2 * H:3 * H])
    cb = sgb[:, 0:H] * ggb
    h_b_last = sgb[:, 3 * H:4 * H] * jnp.tanh(cb)            # (BP, H)

    # ------------- head: ReLU MLP (eval dropout = identity) + output --------
    def split_matmul(w_ref, b_ref):
        # concat([h_f, h_b], -1) @ W + b without materializing the concat.
        return (jnp.dot(h_f_final, w_ref[0:H, :], preferred_element_type=jnp.float32)
                + jnp.dot(h_b_last, w_ref[H:2 * H, :], preferred_element_type=jnp.float32)
                + b_ref[...])

    if n_lin > 0:
        w_ref, b_ref = lin_p[0]
        a = jnp.maximum(split_matmul(w_ref, b_ref), 0.0)
        for w_ref, b_ref in lin_p[1:]:
            a = jnp.maximum(
                jnp.dot(a, w_ref[...], preferred_element_type=jnp.float32) + b_ref[...],
                0.0)
        logits = jnp.dot(a, wo_ref[...], preferred_element_type=jnp.float32) + bo_ref[...]
    else:
        logits = split_matmul(wo_ref, bo_ref)

    # 2-class softmax == sigmoid of the logit difference (drops exp/max/divide),
    # then (p - 0.5) * 1.2 + 0.5 and clamp(0, 1) (eval mode).
    p1 = jax.nn.sigmoid(logits[:, 1:2] - logits[:, 0:1])
    p = jnp.concatenate([1.0 - p1, p1], axis=-1)             # (BP, 2)
    p = (p - 0.5) * 1.2 + 0.5
    out_ref[...] = jnp.clip(p, 0.0, 1.0)


# ----------------------------------------------------------------------------
# Wrapper: one pallas_call for the whole network.
# ----------------------------------------------------------------------------
def forward(packed, x, hidden, num_layers):
    B, T, D = x.shape
    H = hidden
    BP = ((B + 7) // 8) * 8                  # pad batch to the f32 sublane tile
    if BP != B:
        x_pad = jnp.zeros((BP, T, D), x.dtype).at[:B].set(x)
    else:
        x_pad = x
    xt = jnp.transpose(x_pad, (1, 0, 2))     # (T, BP, D), time-major
    if num_layers >= 2:
        # Layer-0 fused-direction input: pair fwd time s with bwd time T-1-s.
        seq0 = jnp.concatenate([xt, xt[::-1]], axis=-1).reshape(T * BP, 2 * D)
    else:
        seq0 = xt.reshape(T * BP, D)

    inputs = [seq0]
    for layer in packed["fused"]:
        inputs += list(layer)                # w_ih_pair, b_pair, w_hh_pack
    inputs += list(packed["last"])           # w_ih_last, b_last, w_hh_f_last
    for w, b in packed["lins"]:
        inputs += [w, b]
    inputs += [packed["out"][0], packed["out"][1]]

    n_lin = len(packed["lins"])
    kernel = functools.partial(_fused_kernel, num_layers=num_layers,
                               n_lin=n_lin, hidden=H, T=T, BP=BP)
    out = pl.pallas_call(
        kernel,
        out_shape=jax.ShapeDtypeStruct((BP, 2), jnp.float32),
        in_specs=[pl.BlockSpec(memory_space=pltpu.MemorySpace.VMEM)] * len(inputs),
        out_specs=pl.BlockSpec(memory_space=pltpu.MemorySpace.VMEM),
        scratch_shapes=[pltpu.VMEM((T * BP, 8 * H), jnp.float32),
                        pltpu.VMEM((T * BP, 2 * H), jnp.float32)],
    )(*inputs)
    return out[:B]


forward_jit = jax.jit(forward, static_argnums=(2, 3))


# ----------------------------------------------------------------------------
# Parameter packing for the kernel (block-diagonal / gate-interleaved layouts).
# Canonical per-direction params stay untouched for the reference.
# ----------------------------------------------------------------------------
def pack_params(params, hidden, num_layers):
    H = hidden

    def interleave_cols(wf, wb):
        blocks = []
        for g in range(4):                   # gate order (i, f, g, o)
            blocks.append(wf[:, g * H:(g + 1) * H])
            blocks.append(wb[:, g * H:(g + 1) * H])
        return jnp.concatenate(blocks, axis=1)

    packed = {"fused": [], "last": None,
              "lins": list(params["lins"]), "out": params["out"]}
    for l in range(num_layers):
        w_ih_f, w_ih_b, w_hh_f, w_hh_b, b_f, b_b = params["lstm"][l]
        if l < num_layers - 1:
            zi = jnp.zeros_like(w_ih_f)
            w_ih_pair = jnp.concatenate([interleave_cols(w_ih_f, zi),
                                         interleave_cols(zi, w_ih_b)], axis=0)
            zh = jnp.zeros_like(w_hh_f)
            w_hh_pack = jnp.concatenate([interleave_cols(w_hh_f, zh),
                                         interleave_cols(zh, w_hh_b)], axis=0)
            b_pair = interleave_cols(b_f, b_b)
            packed["fused"].append((w_ih_pair, b_pair, w_hh_pack))
        else:
            w_ih_last = jnp.concatenate([w_ih_f, w_ih_b], axis=1)
            b_last = jnp.concatenate([b_f, b_b], axis=1)
            packed["last"] = (w_ih_last, b_last, w_hh_f)
    return packed


# ----------------------------------------------------------------------------
# Pure-JAX reference (same math, full f32 matmul precision).
# ----------------------------------------------------------------------------
def forward_ref(params, x, hidden, num_layers):
    H = hidden
    hp = jax.lax.Precision.HIGHEST
    B, T, _ = x.shape
    inp = jnp.transpose(x, (1, 0, 2))        # (T, B, D)
    for l in range(num_layers):
        w_ih_f, w_ih_b, w_hh_f, w_hh_b, b_f, b_b = params["lstm"][l]
        dir_outs = []
        for rev, wih, whh, b in ((False, w_ih_f, w_hh_f, b_f),
                                 (True, w_ih_b, w_hh_b, b_b)):
            h = jnp.zeros((B, H), jnp.float32)
            c = jnp.zeros((B, H), jnp.float32)
            hs = [None] * T
            order = range(T - 1, -1, -1) if rev else range(T)
            for t in order:
                g = (jnp.dot(inp[t], wih, precision=hp)
                     + jnp.dot(h, whh, precision=hp) + b)
                i_g = jax.nn.sigmoid(g[:, 0:H])
                f_g = jax.nn.sigmoid(g[:, H:2 * H])
                g_g = jnp.tanh(g[:, 2 * H:3 * H])
                o_g = jax.nn.sigmoid(g[:, 3 * H:4 * H])
                c = f_g * c + i_g * g_g
                h = o_g * jnp.tanh(c)
                hs[t] = h
            dir_outs.append(jnp.stack(hs, 0))
        inp = jnp.concatenate(dir_outs, axis=-1)
    a = inp[-1]
    for w, bb in params["lins"]:
        a = jnp.maximum(jnp.dot(a, w, precision=hp) + bb, 0.0)
    w_o, b_o = params["out"]
    p = jax.nn.softmax(jnp.dot(a, w_o, precision=hp) + b_o, axis=-1)
    p = (p - 0.5) * 1.2 + 0.5
    return jnp.clip(p, 0.0, 1.0)


# ----------------------------------------------------------------------------
# Deterministic parameter init (shapes consistent with torch.nn.LSTM / Linear;
# per-direction weights with gate order (i, f, g, o); b = b_ih + b_hh folded).
# ----------------------------------------------------------------------------
def init_params(key, inputsize, hidden, num_layers, lin_sizes):
    H = hidden
    params = {"lstm": [], "lins": [], "out": None}
    keys = iter(jax.random.split(key, 6 * num_layers + 2 * len(lin_sizes) + 2))
    k = 1.0 / (H ** 0.5)

    def u(shape):
        return jax.random.uniform(next(keys), shape, minval=-k, maxval=k,
                                  dtype=jnp.float32)

    for l in range(num_layers):
        d_in = inputsize if l == 0 else 2 * H
        params["lstm"].append((u((d_in, 4 * H)), u((d_in, 4 * H)),   # w_ih fwd/bwd
                               u((H, 4 * H)), u((H, 4 * H)),         # w_hh fwd/bwd
                               u((1, 4 * H)), u((1, 4 * H))))        # b   fwd/bwd
    prev = 2 * H
    for s in lin_sizes:
        kk = 1.0 / (prev ** 0.5)
        w = jax.random.uniform(next(keys), (prev, s), minval=-kk, maxval=kk,
                               dtype=jnp.float32)
        bb = jax.random.uniform(next(keys), (1, s), minval=-kk, maxval=kk,
                                dtype=jnp.float32)
        params["lins"].append((w, bb))
        prev = s
    kk = 1.0 / (prev ** 0.5)
    params["out"] = (
        jax.random.uniform(next(keys), (prev, 2), minval=-kk, maxval=kk,
                           dtype=jnp.float32),
        jax.random.uniform(next(keys), (1, 2), minval=-kk, maxval=kk,
                           dtype=jnp.float32))
    return params


if __name__ == "__main__":
    B, T, D = 4, 8, 16          # batch, sequence length, inputsize
    HIDDEN, LAYERS = 32, 2      # quant_lstm_hidden_size, quant_lstm_layers
    LIN_SIZES = [64, 32]        # quant_lin_layers_sizes

    key = jax.random.PRNGKey(0)
    kp, kx = jax.random.split(key)
    params = init_params(kp, D, HIDDEN, LAYERS, LIN_SIZES)
    packed = pack_params(params, HIDDEN, LAYERS)
    x = jax.random.normal(kx, (B, T, D), dtype=jnp.float32)

    out = jax.block_until_ready(forward_jit(packed, x, HIDDEN, LAYERS))
    assert out.shape == (B, 2), out.shape

    ref = jax.block_until_ready(forward_ref(params, x, HIDDEN, LAYERS))
    assert jnp.allclose(out, ref, atol=1e-4, rtol=1e-4), (out, ref)

    print("KERNEL_OK")
</pallas_src>

<mosaic_0001>
module attributes {stable_mosaic.version = 11 : i64} {
  func.func @_fused_kernel(%arg0: memref<64x32xf32, #tpu.memory_space<vmem>>, %arg1: memref<32x256xf32, #tpu.memory_space<vmem>>, %arg2: memref<1x256xf32, #tpu.memory_space<vmem>>, %arg3: memref<64x256xf32, #tpu.memory_space<vmem>>, %arg4: memref<64x256xf32, #tpu.memory_space<vmem>>, %arg5: memref<1x256xf32, #tpu.memory_space<vmem>>, %arg6: memref<32x128xf32, #tpu.memory_space<vmem>>, %arg7: memref<64x64xf32, #tpu.memory_space<vmem>>, %arg8: memref<1x64xf32, #tpu.memory_space<vmem>>, %arg9: memref<64x32xf32, #tpu.memory_space<vmem>>, %arg10: memref<1x32xf32, #tpu.memory_space<vmem>>, %arg11: memref<32x2xf32, #tpu.memory_space<vmem>>, %arg12: memref<1x2xf32, #tpu.memory_space<vmem>>, %arg13: memref<8x2xf32, #tpu.memory_space<vmem>>, %arg14: memref<64x256xf32, #tpu.memory_space<vmem>>, %arg15: memref<64x64xf32, #tpu.memory_space<vmem>>) attributes {dimension_semantics = [], scalar_prefetch = 0 : i64, scratch_operands = 2 : i64, tpu.core_type = #tpu.core_type<tc>} {
    %c0 = arith.constant 0 : index
    %c0_0 = arith.constant 0 : index
    %0 = vector.load %arg0[%c0, %c0_0] : memref<64x32xf32, #tpu.memory_space<vmem>>, vector<64x32xf32>
    %c0_1 = arith.constant 0 : index
    %c0_2 = arith.constant 0 : index
    %1 = vector.load %arg1[%c0_1, %c0_2] : memref<32x256xf32, #tpu.memory_space<vmem>>, vector<32x256xf32>
    %cst = arith.constant dense<0.000000e+00> : vector<64x256xf32>
    %2 = tpu.matmul %0, %1, %cst {dimension_numbers = #tpu.dot_dimension_numbers<[1], [0], [0], [1], [0, 0, 1, 1], [], []>} : vector<64x32xf32>, vector<32x256xf32>, vector<64x256xf32> -> vector<64x256xf32>
    %c0_3 = arith.constant 0 : index
    %c0_4 = arith.constant 0 : index
    %3 = vector.load %arg2[%c0_3, %c0_4] : memref<1x256xf32, #tpu.memory_space<vmem>>, vector<1x256xf32>
    %4 = vector.broadcast %3 : vector<1x256xf32> to vector<64x256xf32>
    %5 = arith.addf %2, %4 : vector<64x256xf32>
    %c0_5 = arith.constant 0 : index
    %c0_6 = arith.constant 0 : index
    %6 = vector.load %arg14[%c0_5, %c0_6] : memref<64x256xf32, #tpu.memory_space<vmem>>, vector<64x256xf32>
    tpu.vector_store %arg14[%c0_5, %c0_6], %5 {strides = array<i32>} : memref<64x256xf32, #tpu.memory_space<vmem>>, vector<64x256xf32>,
    %c0_7 = arith.constant 0 : index
    %c0_8 = arith.constant 0 : index
    %7 = vector.load %arg3[%c0_7, %c0_8] : memref<64x256xf32, #tpu.memory_space<vmem>>, vector<64x256xf32>
    %c0_9 = arith.constant 0 : index
    %c0_10 = arith.constant 0 : index
    %8 = vector.load %arg14[%c0_9, %c0_10] : memref<64x256xf32, #tpu.memory_space<vmem>>, vector<8x256xf32>
    %9 = arith.negf %8 : vector<8x256xf32>
    %10 = math.exp %9 : vector<8x256xf32>
    %cst_11 = arith.constant 1.000000e+00 : f32
    %11 = vector.broadcast %cst_11 : f32 to vector<8x256xf32>
    %12 = arith.addf %11, %10 : vector<8x256xf32>
    %13 = arith.divf %11, %12 : vector<8x256xf32>
    %14 = vector.extract_strided_slice %8 {offsets = [0, 128], sizes = [8, 64], strides = [1, 1]} : vector<8x256xf32> to vector<8x64xf32>
    %15 = math.tanh %14 : vector<8x64xf32>
    %16 = vector.extract_strided_slice %13 {offsets = [0, 0], sizes = [8, 64], strides = [1, 1]} : vector<8x256xf32> to vector<8x64xf32>
    %17 = vector.extract_strided_slice %13 {offsets = [0, 192], sizes = [8, 64], strides = [1, 1]} : vector<8x256xf32> to vector<8x64xf32>
    %18 = arith.mulf %16, %15 : vector<8x64xf32>
    %19 = math.tanh %18 : vector<8x64xf32>
    %20 = arith.mulf %17, %19 : vector<8x64xf32>
    %21 = vector.extract_strided_slice %20 {offsets = [0, 0], sizes = [8, 32], strides = [1, 1]} : vector<8x64xf32> to vector<8x32xf32>
    %c0_12 = arith.constant 0 : index
    %c0_13 = arith.constant 0 : index
    %22 = vector.load %arg15[%c0_12, %c0_13] : memref<64x64xf32, #tpu.memory_space<vmem>>, vector<8x32xf32>
    tpu.vector_store %arg15[%c0_12, %c0_13], %21 {strides = array<i32>} : memref<64x64xf32, #tpu.memory_space<vmem>>, vector<8x32xf32>,
    %23 = vector.extract_strided_slice %20 {offsets = [0, 32], sizes = [8, 32], strides = [1, 1]} : vector<8x64xf32> to vector<8x32xf32>
    %c56 = arith.constant 56 : index
    %c32 = arith.constant 32 : index
    %24 = vector.load %arg15[%c56, %c32] : memref<64x64xf32, #tpu.memory_space<vmem>>, vector<8x32xf32>
    tpu.vector_store %arg15[%c56, %c32], %23 {strides = array<i32>} : memref<64x64xf32, #tpu.memory_space<vmem>>, vector<8x32xf32>,
    %c8 = arith.constant 8 : index
    %c0_14 = arith.constant 0 : index
    %25 = vector.load %arg14[%c8, %c0_14] : memref<64x256xf32, #tpu.memory_space<vmem>>, vector<8x256xf32>
    %cst_15 = arith.constant dense<0.000000e+00> : vector<8x256xf32>
    %26 = tpu.matmul %20, %7, %cst_15 {dimension_numbers = #tpu.dot_dimension_numbers<[1], [0], [0], [1], [0, 0, 1, 1], [], []>} : vector<8x64xf32>, vector<64x256xf32>, vector<8x256xf32> -> vector<8x256xf32>
    %27 = arith.addf %25, %26 : vector<8x256xf32>
    %28 = arith.negf %27 : vector<8x256xf32>
    %29 = math.exp %28 : vector<8x256xf32>
    %cst_16 = arith.constant 1.000000e+00 : f32
    %30 = vector.broadcast %cst_16 : f32 to vector<8x256xf32>
    %31 = arith.addf %30, %29 : vector<8x256xf32>
    %32 = arith.divf %30, %31 : vector<8x256xf32>
    %33 = vector.extract_strided_slice %27 {offsets = [0, 128], sizes = [8, 64], strides = [1, 1]} : vector<8x256xf32> to vector<8x64xf32>
    %34 = math.tanh %33 : vector<8x64xf32>
    %35 = vector.extract_strided_slice %32 {offsets = [0, 0], sizes = [8, 64], strides = [1, 1]} : vector<8x256xf32> to vector<8x64xf32>
    %36 = vector.extract_strided_slice %32 {offsets = [0, 192], sizes = [8, 64], strides = [1, 1]} : vector<8x256xf32> to vector<8x64xf32>
    %37 = vector.extract_strided_slice %32 {offsets = [0, 64], sizes = [8, 64], strides = [1, 1]} : vector<8x256xf32> to vector<8x64xf32>
    %38 = arith.mulf %37, %18 : vector<8x64xf32>
    %39 = arith.mulf %35, %34 : vector<8x64xf32>
    %40 = arith.addf %38, %39 : vector<8x64xf32>
    %41 = math.tanh %40 : vector<8x64xf32>
    %42 = arith.mulf %36, %41 : vector<8x64xf32>
    %43 = vector.extract_strided_slice %42 {offsets = [0, 0], sizes = [8, 32], strides = [1, 1]} : vector<8x64xf32> to vector<8x32xf32>
    %c8_17 = arith.constant 8 : index
    %c0_18 = arith.constant 0 : index
    %44 = vector.load %arg15[%c8_17, %c0_18] : memref<64x64xf32, #tpu.memory_space<vmem>>, vector<8x32xf32>
    tpu.vector_store %arg15[%c8_17, %c0_18], %43 {strides = array<i32>} : memref<64x64xf32, #tpu.memory_space<vmem>>, vector<8x32xf32>,
    %45 = vector.extract_strided_slice %42 {offsets = [0, 32], sizes = [8, 32], strides = [1, 1]} : vector<8x64xf32> to vector<8x32xf32>
    %c48 = arith.constant 48 : index
    %c32_19 = arith.constant 32 : index
    %46 = vector.load %arg15[%c48, %c32_19] : memref<64x64xf32, #tpu.memory_space<vmem>>, vector<8x32xf32>
    tpu.vector_store %arg15[%c48, %c32_19], %45 {strides = array<i32>} : memref<64x64xf32, #tpu.memory_space<vmem>>, vector<8x32xf32>,
    %c16 = arith.constant 16 : index
    %c0_20 = arith.constant 0 : index
    %47 = vector.load %arg14[%c16, %c0_20] : memref<64x256xf32, #tpu.memory_space<vmem>>, vector<8x256xf32>
    %cst_21 = arith.constant dense<0.000000e+00> : vector<8x256xf32>
    %48 = tpu.matmul %42, %7, %cst_21 {dimension_numbers = #tpu.dot_dimension_numbers<[1], [0], [0], [1], [0, 0, 1, 1], [], []>} : vector<8x64xf32>, vector<64x256xf32>, vector<8x256xf32> -> vector<8x256xf32>
    %49 = arith.addf %47, %48 : vector<8x256xf32>
    %50 = arith.negf %49 : vector<8x256xf32>
    %51 = math.exp %50 : vector<8x256xf32>
    %cst_22 = arith.constant 1.000000e+00 : f32
    %52 = vector.broadcast %cst_22 : f32 to vector<8x256xf32>
    %53 = arith.addf %52, %51 : vector<8x256xf32>
    %54 = arith.divf %52, %53 : vector<8x256xf32>
    %55 = vector.extract_strided_slice %49 {offsets = [0, 128], sizes = [8, 64], strides = [1, 1]} : vector<8x256xf32> to vector<8x64xf32>
    %56 = math.tanh %55 : vector<8x64xf32>
    %57 = vector.extract_strided_slice %54 {offsets = [0, 0], sizes = [8, 64], strides = [1, 1]} : vector<8x256xf32> to vector<8x64xf32>
    %58 = vector.extract_strided_slice %54 {offsets = [0, 192], sizes = [8, 64], strides = [1, 1]} : vector<8x256xf32> to vector<8x64xf32>
    %59 = vector.extract_strided_slice %54 {offsets = [0, 64], sizes = [8, 64], strides = [1, 1]} : vector<8x256xf32> to vector<8x64xf32>
    %60 = arith.mulf %59, %40 : vector<8x64xf32>
    %61 = arith.mulf %57, %56 : vector<8x64xf32>
    %62 = arith.addf %60, %61 : vector<8x64xf32>
    %63 = math.tanh %62 : vector<8x64xf32>
    %64 = arith.mulf %58, %63 : vector<8x64xf32>
    %65 = vector.extract_strided_slice %64 {offsets = [0, 0], sizes = [8, 32], strides = [1, 1]} : vector<8x64xf32> to vector<8x32xf32>
    %c16_23 = arith.constant 16 : index
    %c0_24 = arith.constant 0 : index
    %66 = vector.load %arg15[%c16_23, %c0_24] : memref<64x64xf32, #tpu.memory_space<vmem>>, vector<8x32xf32>
    tpu.vector_store %arg15[%c16_23, %c0_24], %65 {strides = array<i32>} : memref<64x64xf32, #tpu.memory_space<vmem>>, vector<8x32xf32>,
    %67 = vector.extract_strided_slice %64 {offsets = [0, 32], sizes = [8, 32], strides = [1, 1]} : vector<8x64xf32> to vector<8x32xf32>
    %c40 = arith.constant 40 : index
    %c32_25 = arith.constant 32 : index
    %68 = vector.load %arg15[%c40, %c32_25] : memref<64x64xf32, #tpu.memory_space<vmem>>, vector<8x32xf32>
    tpu.vector_store %arg15[%c40, %c32_25], %67 {strides = array<i32>} : memref<64x64xf32, #tpu.memory_space<vmem>>, vector<8x32xf32>,
    %c24 = arith.constant 24 : index
    %c0_26 = arith.constant 0 : index
    %69 = vector.load %arg14[%c24, %c0_26] : memref<64x256xf32, #tpu.memory_space<vmem>>, vector<8x256xf32>
    %cst_27 = arith.constant dense<0.000000e+00> : vector<8x256xf32>
    %70 = tpu.matmul %64, %7, %cst_27 {dimension_numbers = #tpu.dot_dimension_numbers<[1], [0], [0], [1], [0, 0, 1, 1], [], []>} : vector<8x64xf32>, vector<64x256xf32>, vector<8x256xf32> -> vector<8x256xf32>
    %71 = arith.addf %69, %70 : vector<8x256xf32>
    %72 = arith.negf %71 : vector<8x256xf32>
    %73 = math.exp %72 : vector<8x256xf32>
    %cst_28 = arith.constant 1.000000e+00 : f32
    %74 = vector.broadcast %cst_28 : f32 to vector<8x256xf32>
    %75 = arith.addf %74, %73 : vector<8x256xf32>
    %76 = arith.divf %74, %75 : vector<8x256xf32>
    %77 = vector.extract_strided_slice %71 {offsets = [0, 128], sizes = [8, 64], strides = [1, 1]} : vector<8x256xf32> to vector<8x64xf32>
    %78 = math.tanh %77 : vector<8x64xf32>
    %79 = vector.extract_strided_slice %76 {offsets = [0, 0], sizes = [8, 64], strides = [1, 1]} : vector<8x256xf32> to vector<8x64xf32>
    %80 = vector.extract_strided_slice %76 {offsets = [0, 192], sizes = [8, 64], strides = [1, 1]} : vector<8x256xf32> to vector<8x64xf32>
    %81 = vector.extract_strided_slice %76 {offsets = [0, 64], sizes = [8, 64], strides = [1, 1]} : vector<8x256xf32> to vector<8x64xf32>
    %82 = arith.mulf %81, %62 : vector<8x64xf32>
    %83 = arith.mulf %79, %78 : vector<8x64xf32>
    %84 = arith.addf %82, %83 : vector<8x64xf32>
    %85 = math.tanh %84 : vector<8x64xf32>
    %86 = arith.mulf %80, %85 : vector<8x64xf32>
    %87 = vector.extract_strided_slice %86 {offsets = [0, 0], sizes = [8, 32], strides = [1, 1]} : vector<8x64xf32> to vector<8x32xf32>
    %c24_29 = arith.constant 24 : index
    %c0_30 = arith.constant 0 : index
    %88 = vector.load %arg15[%c24_29, %c0_30] : memref<64x64xf32, #tpu.memory_space<vmem>>, vector<8x32xf32>
    tpu.vector_store %arg15[%c24_29, %c0_30], %87 {strides = array<i32>} : memref<64x64xf32, #tpu.memory_space<vmem>>, vector<8x32xf32>,
    %89 = vector.extract_strided_slice %86 {offsets = [0, 32], sizes = [8, 32], strides = [1, 1]} : vector<8x64xf32> to vector<8x32xf32>
    %c32_31 = arith.constant 32 : index
    %c32_32 = arith.constant 32 : index
    %90 = vector.load %arg15[%c32_31, %c32_32] : memref<64x64xf32, #tpu.memory_space<vmem>>, vector<8x32xf32>
    tpu.vector_store %arg15[%c32_31, %c32_32], %89 {strides = array<i32>} : memref<64x64xf32, #tpu.memory_space<vmem>>, vector<8x32xf32>,
    %c32_33 = arith.constant 32 : index
    %c0_34 = arith.constant 0 : index
    %91 = vector.load %arg14[%c32_33, %c0_34] : memref<64x256xf32, #tpu.memory_space<vmem>>, vector<8x256xf32>
    %cst_35 = arith.constant dense<0.000000e+00> : vector<8x256xf32>
    %92 = tpu.matmul %86, %7, %cst_35 {dimension_numbers = #tpu.dot_dimension_numbers<[1], [0], [0], [1], [0, 0, 1, 1], [], []>} : vector<8x64xf32>, vector<64x256xf32>, vector<8x256xf32> -> vector<8x256xf32>
    %93 = arith.addf %91, %92 : vector<8x256xf32>
    %94 = arith.negf %93 : vector<8x256xf32>
    %95 = math.exp %94 : vector<8x256xf32>
    %cst_36 = arith.constant 1.000000e+00 : f32
    %96 = vector.broadcast %cst_36 : f32 to vector<8x256xf32>
    %97 = arith.addf %96, %95 : vector<8x256xf32>
    %98 = arith.divf %96, %97 : vector<8x256xf32>
    %99 = vector.extract_strided_slice %93 {offsets = [0, 128], sizes = [8, 64], strides = [1, 1]} : vector<8x256xf32> to vector<8x64xf32>
    %100 = math.tanh %99 : vector<8x64xf32>
    %101 = vector.extract_strided_slice %98 {offsets = [0, 0], sizes = [8, 64], strides = [1, 1]} : vector<8x256xf32> to vector<8x64xf32>
    %102 = vector.extract_strided_slice %98 {offsets = [0, 192], sizes = [8, 64], strides = [1, 1]} : vector<8x256xf32> to vector<8x64xf32>
    %103 = vector.extract_strided_slice %98 {offsets = [0, 64], sizes = [8, 64], strides = [1, 1]} : vector<8x256xf32> to vector<8x64xf32>
    %104 = arith.mulf %103, %84 : vector<8x64xf32>
    %105 = arith.mulf %101, %100 : vector<8x64xf32>
    %106 = arith.addf %104, %105 : vector<8x64xf32>
    %107 = math.tanh %106 : vector<8x64xf32>
    %108 = arith.mulf %102, %107 : vector<8x64xf32>
    %109 = vector.extract_strided_slice %108 {offsets = [0, 0], sizes = [8, 32], strides = [1, 1]} : vector<8x64xf32> to vector<8x32xf32>
    %c32_37 = arith.constant 32 : index
    %c0_38 = arith.constant 0 : index
    %110 = vector.load %arg15[%c32_37, %c0_38] : memref<64x64xf32, #tpu.memory_space<vmem>>, vector<8x32xf32>
    tpu.vector_store %arg15[%c32_37, %c0_38], %109 {strides = array<i32>} : memref<64x64xf32, #tpu.memory_space<vmem>>, vector<8x32xf32>,
    %111 = vector.extract_strided_slice %108 {offsets = [0, 32], sizes = [8, 32], strides = [1, 1]} : vector<8x64xf32> to vector<8x32xf32>
    %c24_39 = arith.constant 24 : index
    %c32_40 = arith.constant 32 : index
    %112 = vector.load %arg15[%c24_39, %c32_40] : memref<64x64xf32, #tpu.memory_space<vmem>>, vector<8x32xf32>
    tpu.vector_store %arg15[%c24_39, %c32_40], %111 {strides = array<i32>} : memref<64x64xf32, #tpu.memory_space<vmem>>, vector<8x32xf32>,
    %c40_41 = arith.constant 40 : index
    %c0_42 = arith.constant 0 : index
    %113 = vector.load %arg14[%c40_41, %c0_42] : memref<64x256xf32, #tpu.memory_space<vmem>>, vector<8x256xf32>
    %cst_43 = arith.constant dense<0.000000e+00> : vector<8x256xf32>
    %114 = tpu.matmul %108, %7, %cst_43 {dimension_numbers = #tpu.dot_dimension_numbers<[1], [0], [0], [1], [0, 0, 1, 1], [], []>} : vector<8x64xf32>, vector<64x256xf32>, vector<8x256xf32> -> vector<8x256xf32>
    %115 = arith.addf %113, %114 : vector<8x256xf32>
    %116 = arith.negf %115 : vector<8x256xf32>
    %117 = math.exp %116 : vector<8x256xf32>
    %cst_44 = arith.constant 1.000000e+00 : f32
    %118 = vector.broadcast %cst_44 : f32 to vector<8x256xf32>
    %119 = arith.addf %118, %117 : vector<8x256xf32>
    %120 = arith.divf %118, %119 : vector<8x256xf32>
    %121 = vector.extract_strided_slice %115 {offsets = [0, 128], sizes = [8, 64], strides = [1, 1]} : vector<8x256xf32> to vector<8x64xf32>
    %122 = math.tanh %121 : vector<8x64xf32>
    %123 = vector.extract_strided_slice %120 {offsets = [0, 0], sizes = [8, 64], strides = [1, 1]} : vector<8x256xf32> to vector<8x64xf32>
    %124 = vector.extract_strided_slice %120 {offsets = [0, 192], sizes = [8, 64], strides = [1, 1]} : vector<8x256xf32> to vector<8x64xf32>
    %125 = vector.extract_strided_slice %120 {offsets = [0, 64], sizes = [8, 64], strides = [1, 1]} : vector<8x256xf32> to vector<8x64xf32>
    %126 = arith.mulf %125, %106 : vector<8x64xf32>
    %127 = arith.mulf %123, %122 : vector<8x64xf32>
    %128 = arith.addf %126, %127 : vector<8x64xf32>
    %129 = math.tanh %128 : vector<8x64xf32>
    %130 = arith.mulf %124, %129 : vector<8x64xf32>
    %131 = vector.extract_strided_slice %130 {offsets = [0, 0], sizes = [8, 32], strides = [1, 1]} : vector<8x64xf32> to vector<8x32xf32>
    %c40_45 = arith.constant 40 : index
    %c0_46 = arith.constant 0 : index
    %132 = vector.load %arg15[%c40_45, %c0_46] : memref<64x64xf32, #tpu.memory_space<vmem>>, vector<8x32xf32>
    tpu.vector_store %arg15[%c40_45, %c0_46], %131 {strides = array<i32>} : memref<64x64xf32, #tpu.memory_space<vmem>>, vector<8x32xf32>,
    %133 = vector.extract_strided_slice %130 {offsets = [0, 32], sizes = [8, 32], strides = [1, 1]} : vector<8x64xf32> to vector<8x32xf32>
    %c16_47 = arith.constant 16 : index
    %c32_48 = arith.constant 32 : index
    %134 = vector.load %arg15[%c16_47, %c32_48] : memref<64x64xf32, #tpu.memory_space<vmem>>, vector<8x32xf32>
    tpu.vector_store %arg15[%c16_47, %c32_48], %133 {strides = array<i32>} : memref<64x64xf32, #tpu.memory_space<vmem>>, vector<8x32xf32>,
    %c48_49 = arith.constant 48 : index
    %c0_50 = arith.constant 0 : index
    %135 = vector.load %arg14[%c48_49, %c0_50] : memref<64x256xf32, #tpu.memory_space<vmem>>, vector<8x256xf32>
    %cst_51 = arith.constant dense<0.000000e+00> : vector<8x256xf32>
    %136 = tpu.matmul %130, %7, %cst_51 {dimension_numbers = #tpu.dot_dimension_numbers<[1], [0], [0], [1], [0, 0, 1, 1], [], []>} : vector<8x64xf32>, vector<64x256xf32>, vector<8x256xf32> -> vector<8x256xf32>
    %137 = arith.addf %135, %136 : vector<8x256xf32>
    %138 = arith.negf %137 : vector<8x256xf32>
    %139 = math.exp %138 : vector<8x256xf32>
    %cst_52 = arith.constant 1.000000e+00 : f32
    %140 = vector.broadcast %cst_52 : f32 to vector<8x256xf32>
    %141 = arith.addf %140, %139 : vector<8x256xf32>
    %142 = arith.divf %140, %141 : vector<8x256xf32>
    %143 = vector.extract_strided_slice %137 {offsets = [0, 128], sizes = [8, 64], strides = [1, 1]} : vector<8x256xf32> to vector<8x64xf32>
    %144 = math.tanh %143 : vector<8x64xf32>
    %145 = vector.extract_strided_slice %142 {offsets = [0, 0], sizes = [8, 64], strides = [1, 1]} : vector<8x256xf32> to vector<8x64xf32>
    %146 = vector.extract_strided_slice %142 {offsets = [0, 192], sizes = [8, 64], strides = [1, 1]} : vector<8x256xf32> to vector<8x64xf32>
    %147 = vector.extract_strided_slice %142 {offsets = [0, 64], sizes = [8, 64], strides = [1, 1]} : vector<8x256xf32> to vector<8x64xf32>
    %148 = arith.mulf %147, %128 : vector<8x64xf32>
    %149 = arith.mulf %145, %144 : vector<8x64xf32>
    %150 = arith.addf %148, %149 : vector<8x64xf32>
    %151 = math.tanh %150 : vector<8x64xf32>
    %152 = arith.mulf %146, %151 : vector<8x64xf32>
    %153 = vector.extract_strided_slice %152 {offsets = [0, 0], sizes = [8, 32], strides = [1, 1]} : vector<8x64xf32> to vector<8x32xf32>
    %c48_53 = arith.constant 48 : index
    %c0_54 = arith.constant 0 : index
    %154 = vector.load %arg15[%c48_53, %c0_54] : memref<64x64xf32, #tpu.memory_space<vmem>>, vector<8x32xf32>
    tpu.vector_store %arg15[%c48_53, %c0_54], %153 {strides = array<i32>} : memref<64x64xf32, #tpu.memory_space<vmem>>, vector<8x32xf32>,
    %155 = vector.extract_strided_slice %152 {offsets = [0, 32], sizes = [8, 32], strides = [1, 1]} : vector<8x64xf32> to vector<8x32xf32>
    %c8_55 = arith.constant 8 : index
    %c32_56 = arith.constant 32 : index
    %156 = vector.load %arg15[%c8_55, %c32_56] : memref<64x64xf32, #tpu.memory_space<vmem>>, vector<8x32xf32>
    tpu.vector_store %arg15[%c8_55, %c32_56], %155 {strides = array<i32>} : memref<64x64xf32, #tpu.memory_space<vmem>>, vector<8x32xf32>,
    %c56_57 = arith.constant 56 : index
    %c0_58 = arith.constant 0 : index
    %157 = vector.load %arg14[%c56_57, %c0_58] : memref<64x256xf32, #tpu.memory_space<vmem>>, vector<8x256xf32>
    %cst_59 = arith.constant dense<0.000000e+00> : vector<8x256xf32>
    %158 = tpu.matmul %152, %7, %cst_59 {dimension_numbers = #tpu.dot_dimension_numbers<[1], [0], [0], [1], [0, 0, 1, 1], [], []>} : vector<8x64xf32>, vector<64x256xf32>, vector<8x256xf32> -> vector<8x256xf32>
    %159 = arith.addf %157, %158 : vector<8x256xf32>
    %160 = arith.negf %159 : vector<8x256xf32>
    %161 = math.exp %160 : vector<8x256xf32>
    %cst_60 = arith.constant 1.000000e+00 : f32
    %162 = vector.broadcast %cst_60 : f32 to vector<8x256xf32>
    %163 = arith.addf %162, %161 : vector<8x256xf32>
    %164 = arith.divf %162, %163 : vector<8x256xf32>
    %165 = vector.extract_strided_slice %159 {offsets = [0, 128], sizes = [8, 64], strides = [1, 1]} : vector<8x256xf32> to vector<8x64xf32>
    %166 = math.tanh %165 : vector<8x64xf32>
    %167 = vector.extract_strided_slice %164 {offsets = [0, 0], sizes = [8, 64], strides = [1, 1]} : vector<8x256xf32> to vector<8x64xf32>
    %168 = vector.extract_strided_slice %164 {offsets = [0, 192], sizes = [8, 64], strides = [1, 1]} : vector<8x256xf32> to vector<8x64xf32>
    %169 = vector.extract_strided_slice %164 {offsets = [0, 64], sizes = [8, 64], strides = [1, 1]} : vector<8x256xf32> to vector<8x64xf32>
    %170 = arith.mulf %169, %150 : vector<8x64xf32>
    %171 = arith.mulf %167, %166 : vector<8x64xf32>
    %172 = arith.addf %170, %171 : vector<8x64xf32>
    %173 = math.tanh %172 : vector<8x64xf32>
    %174 = arith.mulf %168, %173 : vector<8x64xf32>
    %175 = vector.extract_strided_slice %174 {offsets = [0, 0], sizes = [8, 32], strides = [1, 1]} : vector<8x64xf32> to vector<8x32xf32>
    %c56_61 = arith.constant 56 : index
    %c0_62 = arith.constant 0 : index
    %176 = vector.load %arg15[%c56_61, %c0_62] : memref<64x64xf32, #tpu.memory_space<vmem>>, vector<8x32xf32>
    tpu.vector_store %arg15[%c56_61, %c0_62], %175 {strides = array<i32>} : memref<64x64xf32, #tpu.memory_space<vmem>>, vector<8x32xf32>,
    %177 = vector.extract_strided_slice %174 {offsets = [0, 32], sizes = [8, 32], strides = [1, 1]} : vector<8x64xf32> to vector<8x32xf32>
    %c0_63 = arith.constant 0 : index
    %c32_64 = arith.constant 32 : index
    %178 = vector.load %arg15[%c0_63, %c32_64] : memref<64x64xf32, #tpu.memory_space<vmem>>, vector<8x32xf32>
    tpu.vector_store %arg15[%c0_63, %c32_64], %177 {strides = array<i32>} : memref<64x64xf32, #tpu.memory_space<vmem>>, vector<8x32xf32>,
    %c0_65 = arith.constant 0 : index
    %c0_66 = arith.constant 0 : index
    %179 = vector.load %arg15[%c0_65, %c0_66] : memref<64x64xf32, #tpu.memory_space<vmem>>, vector<64x64xf32>
    %c0_67 = arith.constant 0 : index
    %c0_68 = arith.constant 0 : index
    %180 = vector.load %arg4[%c0_67, %c0_68] : memref<64x256xf32, #tpu.memory_space<vmem>>, vector<64x256xf32>
    %cst_69 = arith.constant dense<0.000000e+00> : vector<64x256xf32>
    %181 = tpu.matmul %179, %180, %cst_69 {dimension_numbers = #tpu.dot_dimension_numbers<[1], [0], [0], [1], [0, 0, 1, 1], [], []>} : vector<64x64xf32>, vector<64x256xf32>, vector<64x256xf32> -> vector<64x256xf32>
    %c0_70 = arith.constant 0 : index
    %c0_71 = arith.constant 0 : index
    %182 = vector.load %arg5[%c0_70, %c0_71] : memref<1x256xf32, #tpu.memory_space<vmem>>, vector<1x256xf32>
    %183 = vector.broadcast %182 : vector<1x256xf32> to vector<64x256xf32>
    %184 = arith.addf %181, %183 : vector<64x256xf32>
    %c0_72 = arith.constant 0 : index
    %c0_73 = arith.constant 0 : index
    %185 = vector.load %arg14[%c0_72, %c0_73] : memref<64x256xf32, #tpu.memory_space<vmem>>, vector<64x256xf32>
    tpu.vector_store %arg14[%c0_72, %c0_73], %184 {strides = array<i32>} : memref<64x256xf32, #tpu.memory_space<vmem>>, vector<64x256xf32>,
    %c0_74 = arith.constant 0 : index
    %c0_75 = arith.constant 0 : index
    %186 = vector.load %arg6[%c0_74, %c0_75] : memref<32x128xf32, #tpu.memory_space<vmem>>, vector<32x128xf32>
    %c0_76 = arith.constant 0 : index
    %c0_77 = arith.constant 0 : index
    %187 = vector.load %arg14[%c0_76, %c0_77] : memref<64x256xf32, #tpu.memory_space<vmem>>, vector<8x128xf32>
    %188 = arith.negf %187 : vector<8x128xf32>
    %189 = math.exp %188 : vector<8x128xf32>
    %cst_78 = arith.constant 1.000000e+00 : f32
    %190 = vector.broadcast %cst_78 : f32 to vector<8x128xf32>
    %191 = arith.addf %190, %189 : vector<8x128xf32>
    %192 = arith.divf %190, %191 : vector<8x128xf32>
    %193 = vector.extract_strided_slice %187 {offsets = [0, 64], sizes = [8, 32], strides = [1, 1]} : vector<8x128xf32> to vector<8x32xf32>
    %194 = math.tanh %193 : vector<8x32xf32>
    %195 = vector.extract_strided_slice %192 {offsets = [0, 0], sizes = [8, 32], strides = [1, 1]} : vector<8x128xf32> to vector<8x32xf32>
    %196 = arith.mulf %195, %194 : vector<8x32xf32>
    %197 = vector.extract_strided_slice %192 {offsets = [0, 96], sizes = [8, 32], strides = [1, 1]} : vector<8x128xf32> to vector<8x32xf32>
    %198 = math.tanh %196 : vector<8x32xf32>
    %199 = arith.mulf %197, %198 : vector<8x32xf32>
    %c8_79 = arith.constant 8 : index
    %c0_80 = arith.constant 0 : index
    %200 = vector.load %arg14[%c8_79, %c0_80] : memref<64x256xf32, #tpu.memory_space<vmem>>, vector<8x128xf32>
    %cst_81 = arith.constant dense<0.000000e+00> : vector<8x128xf32>
    %201 = tpu.matmul %199, %186, %cst_81 {dimension_numbers = #tpu.dot_dimension_numbers<[1], [0], [0], [1], [0, 0, 1, 1], [], []>} : vector<8x32xf32>, vector<32x128xf32>, vector<8x128xf32> -> vector<8x128xf32>
    %202 = arith.addf %200, %201 : vector<8x128xf32>
    %203 = arith.negf %202 : vector<8x128xf32>
    %204 = math.exp %203 : vector<8x128xf32>
    %cst_82 = arith.constant 1.000000e+00 : f32
    %205 = vector.broadcast %cst_82 : f32 to vector<8x128xf32>
    %206 = arith.addf %205, %204 : vector<8x128xf32>
    %207 = arith.divf %205, %206 : vector<8x128xf32>
    %208 = vector.extract_strided_slice %202 {offsets = [0, 64], sizes = [8, 32], strides = [1, 1]} : vector<8x128xf32> to vector<8x32xf32>
    %209 = math.tanh %208 : vector<8x32xf32>
    %210 = vector.extract_strided_slice %207 {offsets = [0, 32], sizes = [8, 32], strides = [1, 1]} : vector<8x128xf32> to vector<8x32xf32>
    %211 = arith.mulf %210, %196 : vector<8x32xf32>
    %212 = vector.extract_strided_slice %207 {offsets = [0, 0], sizes = [8, 32], strides = [1, 1]} : vector<8x128xf32> to vector<8x32xf32>
    %213 = arith.mulf %212, %209 : vector<8x32xf32>
    %214 = arith.addf %211, %213 : vector<8x32xf32>
    %215 = vector.extract_strided_slice %207 {offsets = [0, 96], sizes = [8, 32], strides = [1, 1]} : vector<8x128xf32> to vector<8x32xf32>
    %216 = math.tanh %214 : vector<8x32xf32>
    %217 = arith.mulf %215, %216 : vector<8x32xf32>
    %c16_83 = arith.constant 16 : index
    %c0_84 = arith.constant 0 : index
    %218 = vector.load %arg14[%c16_83, %c0_84] : memref<64x256xf32, #tpu.memory_space<vmem>>, vector<8x128xf32>
    %cst_85 = arith.constant dense<0.000000e+00> : vector<8x128xf32>
    %219 = tpu.matmul %217, %186, %cst_85 {dimension_numbers = #tpu.dot_dimension_numbers<[1], [0], [0], [1], [0, 0, 1, 1], [], []>} : vector<8x32xf32>, vector<32x128xf32>, vector<8x128xf32> -> vector<8x128xf32>
    %220 = arith.addf %218, %219 : vector<8x128xf32>
    %221 = arith.negf %220 : vector<8x128xf32>
    %222 = math.exp %221 : vector<8x128xf32>
    %cst_86 = arith.constant 1.000000e+00 : f32
    %223 = vector.broadcast %cst_86 : f32 to vector<8x128xf32>
    %224 = arith.addf %223, %222 : vector<8x128xf32>
    %225 = arith.divf %223, %224 : vector<8x128xf32>
    %226 = vector.extract_strided_slice %220 {offsets = [0, 64], sizes = [8, 32], strides = [1, 1]} : vector<8x128xf32> to vector<8x32xf32>
    %227 = math.tanh %226 : vector<8x32xf32>
    %228 = vector.extract_strided_slice %225 {offsets = [0, 32], sizes = [8, 32], strides = [1, 1]} : vector<8x128xf32> to vector<8x32xf32>
    %229 = arith.mulf %228, %214 : vector<8x32xf32>
    %230 = vector.extract_strided_slice %225 {offsets = [0, 0], sizes = [8, 32], strides = [1, 1]} : vector<8x128xf32> to vector<8x32xf32>
    %231 = arith.mulf %230, %227 : vector<8x32xf32>
    %232 = arith.addf %229, %231 : vector<8x32xf32>
    %233 = vector.extract_strided_slice %225 {offsets = [0, 96], sizes = [8, 32], strides = [1, 1]} : vector<8x128xf32> to vector<8x32xf32>
    %234 = math.tanh %232 : vector<8x32xf32>
    %235 = arith.mulf %233, %234 : vector<8x32xf32>
    %c24_87 = arith.constant 24 : index
    %c0_88 = arith.constant 0 : index
    %236 = vector.load %arg14[%c24_87, %c0_88] : memref<64x256xf32, #tpu.memory_space<vmem>>, vector<8x128xf32>
    %cst_89 = arith.constant dense<0.000000e+00> : vector<8x128xf32>
    %237 = tpu.matmul %235, %186, %cst_89 {dimension_numbers = #tpu.dot_dimension_numbers<[1], [0], [0], [1], [0, 0, 1, 1], [], []>} : vector<8x32xf32>, vector<32x128xf32>, vector<8x128xf32> -> vector<8x128xf32>
    %238 = arith.addf %236, %237 : vector<8x128xf32>
    %239 = arith.negf %238 : vector<8x128xf32>
    %240 = math.exp %239 : vector<8x128xf32>
    %cst_90 = arith.constant 1.000000e+00 : f32
    %241 = vector.broadcast %cst_90 : f32 to vector<8x128xf32>
    %242 = arith.addf %241, %240 : vector<8x128xf32>
    %243 = arith.divf %241, %242 : vector<8x128xf32>
    %244 = vector.extract_strided_slice %238 {offsets = [0, 64], sizes = [8, 32], strides = [1, 1]} : vector<8x128xf32> to vector<8x32xf32>
    %245 = math.tanh %244 : vector<8x32xf32>
    %246 = vector.extract_strided_slice %243 {offsets = [0, 32], sizes = [8, 32], strides = [1, 1]} : vector<8x128xf32> to vector<8x32xf32>
    %247 = arith.mulf %246, %232 : vector<8x32xf32>
    %248 = vector.extract_strided_slice %243 {offsets = [0, 0], sizes = [8, 32], strides = [1, 1]} : vector<8x128xf32> to vector<8x32xf32>
    %249 = arith.mulf %248, %245 : vector<8x32xf32>
    %250 = arith.addf %247, %249 : vector<8x32xf32>
    %251 = vector.extract_strided_slice %243 {offsets = [0, 96], sizes = [8, 32], strides = [1, 1]} : vector<8x128xf32> to vector<8x32xf32>
    %252 = math.tanh %250 : vector<8x32xf32>
    %253 = arith.mulf %251, %252 : vector<8x32xf32>
    %c32_91 = arith.constant 32 : index
    %c0_92 = arith.constant 0 : index
    %254 = vector.load %arg14[%c32_91, %c0_92] : memref<64x256xf32, #tpu.memory_space<vmem>>, vector<8x128xf32>
    %cst_93 = arith.constant dense<0.000000e+00> : vector<8x128xf32>
    %255 = tpu.matmul %253, %186, %cst_93 {dimension_numbers = #tpu.dot_dimension_numbers<[1], [0], [0], [1], [0, 0, 1, 1], [], []>} : vector<8x32xf32>, vector<32x128xf32>, vector<8x128xf32> -> vector<8x128xf32>
    %256 = arith.addf %254, %255 : vector<8x128xf32>
    %257 = arith.negf %256 : vector<8x128xf32>
    %258 = math.exp %257 : vector<8x128xf32>
    %cst_94 = arith.constant 1.000000e+00 : f32
    %259 = vector.broadcast %cst_94 : f32 to vector<8x128xf32>
    %260 = arith.addf %259, %258 : vector<8x128xf32>
    %261 = arith.divf %259, %260 : vector<8x128xf32>
    %262 = vector.extract_strided_slice %256 {offsets = [0, 64], sizes = [8, 32], strides = [1, 1]} : vector<8x128xf32> to vector<8x32xf32>
    %263 = math.tanh %262 : vector<8x32xf32>
    %264 = vector.extract_strided_slice %261 {offsets = [0, 32], sizes = [8, 32], strides = [1, 1]} : vector<8x128xf32> to vector<8x32xf32>
    %265 = arith.mulf %264, %250 : vector<8x32xf32>
    %266 = vector.extract_strided_slice %261 {offsets = [0, 0], sizes = [8, 32], strides = [1, 1]} : vector<8x128xf32> to vector<8x32xf32>
    %267 = arith.mulf %266, %263 : vector<8x32xf32>
    %268 = arith.addf %265, %267 : vector<8x32xf32>
    %269 = vector.extract_strided_slice %261 {offsets = [0, 96], sizes = [8, 32], strides = [1, 1]} : vector<8x128xf32> to vector<8x32xf32>
    %270 = math.tanh %268 : vector<8x32xf32>
    %271 = arith.mulf %269, %270 : vector<8x32xf32>
    %c40_95 = arith.constant 40 : index
    %c0_96 = arith.constant 0 : index
    %272 = vector.load %arg14[%c40_95, %c0_96] : memref<64x256xf32, #tpu.memory_space<vmem>>, vector<8x128xf32>
    %cst_97 = arith.constant dense<0.000000e+00> : vector<8x128xf32>
    %273 = tpu.matmul %271, %186, %cst_97 {dimension_numbers = #tpu.dot_dimension_numbers<[1], [0], [0], [1], [0, 0, 1, 1], [], []>} : vector<8x32xf32>, vector<32x128xf32>, vector<8x128xf32> -> vector<8x128xf32>
    %274 = arith.addf %272, %273 : vector<8x128xf32>
    %275 = arith.negf %274 : vector<8x128xf32>
    %276 = math.exp %275 : vector<8x128xf32>
    %cst_98 = arith.constant 1.000000e+00 : f32
    %277 = vector.broadcast %cst_98 : f32 to vector<8x128xf32>
    %278 = arith.addf %277, %276 : vector<8x128xf32>
    %279 = arith.divf %277, %278 : vector<8x128xf32>
    %280 = vector.extract_strided_slice %274 {offsets = [0, 64], sizes = [8, 32], strides = [1, 1]} : vector<8x128xf32> to vector<8x32xf32>
    %281 = math.tanh %280 : vector<8x32xf32>
    %282 = vector.extract_strided_slice %279 {offsets = [0, 32], sizes = [8, 32], strides = [1, 1]} : vector<8x128xf32> to vector<8x32xf32>
    %283 = arith.mulf %282, %268 : vector<8x32xf32>
    %284 = vector.extract_strided_slice %279 {offsets = [0, 0], sizes = [8, 32], strides = [1, 1]} : vector<8x128xf32> to vector<8x32xf32>
    %285 = arith.mulf %284, %281 : vector<8x32xf32>
    %286 = arith.addf %283, %285 : vector<8x32xf32>
    %287 = vector.extract_strided_slice %279 {offsets = [0, 96], sizes = [8, 32], strides = [1, 1]} : vector<8x128xf32> to vector<8x32xf32>
    %288 = math.tanh %286 : vector<8x32xf32>
    %289 = arith.mulf %287, %288 : vector<8x32xf32>
    %c48_99 = arith.constant 48 : index
    %c0_100 = arith.constant 0 : index
    %290 = vector.load %arg14[%c48_99, %c0_100] : memref<64x256xf32, #tpu.memory_space<vmem>>, vector<8x128xf32>
    %cst_101 = arith.constant dense<0.000000e+00> : vector<8x128xf32>
    %291 = tpu.matmul %289, %186, %cst_101 {dimension_numbers = #tpu.dot_dimension_numbers<[1], [0], [0], [1], [0, 0, 1, 1], [], []>} : vector<8x32xf32>, vector<32x128xf32>, vector<8x128xf32> -> vector<8x128xf32>
    %292 = arith.addf %290, %291 : vector<8x128xf32>
    %293 = arith.negf %292 : vector<8x128xf32>
    %294 = math.exp %293 : vector<8x128xf32>
    %cst_102 = arith.constant 1.000000e+00 : f32
    %295 = vector.broadcast %cst_102 : f32 to vector<8x128xf32>
    %296 = arith.addf %295, %294 : vector<8x128xf32>
    %297 = arith.divf %295, %296 : vector<8x128xf32>
    %298 = vector.extract_strided_slice %292 {offsets = [0, 64], sizes = [8, 32], strides = [1, 1]} : vector<8x128xf32> to vector<8x32xf32>
    %299 = math.tanh %298 : vector<8x32xf32>
    %300 = vector.extract_strided_slice %297 {offsets = [0, 32], sizes = [8, 32], strides = [1, 1]} : vector<8x128xf32> to vector<8x32xf32>
    %301 = arith.mulf %300, %286 : vector<8x32xf32>
    %302 = vector.extract_strided_slice %297 {offsets = [0, 0], sizes = [8, 32], strides = [1, 1]} : vector<8x128xf32> to vector<8x32xf32>
    %303 = arith.mulf %302, %299 : vector<8x32xf32>
    %304 = arith.addf %301, %303 : vector<8x32xf32>
    %305 = vector.extract_strided_slice %297 {offsets = [0, 96], sizes = [8, 32], strides = [1, 1]} : vector<8x128xf32> to vector<8x32xf32>
    %306 = math.tanh %304 : vector<8x32xf32>
    %307 = arith.mulf %305, %306 : vector<8x32xf32>
    %c56_103 = arith.constant 56 : index
    %c0_104 = arith.constant 0 : index
    %308 = vector.load %arg14[%c56_103, %c0_104] : memref<64x256xf32, #tpu.memory_space<vmem>>, vector<8x128xf32>
    %cst_105 = arith.constant dense<0.000000e+00> : vector<8x128xf32>
    %309 = tpu.matmul %307, %186, %cst_105 {dimension_numbers = #tpu.dot_dimension_numbers<[1], [0], [0], [1], [0, 0, 1, 1], [], []>} : vector<8x32xf32>, vector<32x128xf32>, vector<8x128xf32> -> vector<8x128xf32>
    %310 = arith.addf %308, %309 : vector<8x128xf32>
    %311 = arith.negf %310 : vector<8x128xf32>
    %312 = math.exp %311 : vector<8x128xf32>
    %cst_106 = arith.constant 1.000000e+00 : f32
    %313 = vector.broadcast %cst_106 : f32 to vector<8x128xf32>
    %314 = arith.addf %313, %312 : vector<8x128xf32>
    %315 = arith.divf %313, %314 : vector<8x128xf32>
    %316 = vector.extract_strided_slice %310 {offsets = [0, 64], sizes = [8, 32], strides = [1, 1]} : vector<8x128xf32> to vector<8x32xf32>
    %317 = math.tanh %316 : vector<8x32xf32>
    %318 = vector.extract_strided_slice %315 {offsets = [0, 32], sizes = [8, 32], strides = [1, 1]} : vector<8x128xf32> to vector<8x32xf32>
    %319 = arith.mulf %318, %304 : vector<8x32xf32>
    %320 = vector.extract_strided_slice %315 {offsets = [0, 0], sizes = [8, 32], strides = [1, 1]} : vector<8x128xf32> to vector<8x32xf32>
    %321 = arith.mulf %320, %317 : vector<8x32xf32>
    %322 = arith.addf %319, %321 : vector<8x32xf32>
    %323 = vector.extract_strided_slice %315 {offsets = [0, 96], sizes = [8, 32], strides = [1, 1]} : vector<8x128xf32> to vector<8x32xf32>
    %324 = math.tanh %322 : vector<8x32xf32>
    %325 = arith.mulf %323, %324 : vector<8x32xf32>
    %c56_107 = arith.constant 56 : index
    %c128 = arith.constant 128 : index
    %326 = vector.load %arg14[%c56_107, %c128] : memref<64x256xf32, #tpu.memory_space<vmem>>, vector<8x128xf32>
    %327 = arith.negf %326 : vector<8x128xf32>
    %328 = math.exp %327 : vector<8x128xf32>
    %cst_108 = arith.constant 1.000000e+00 : f32
    %329 = vector.broadcast %cst_108 : f32 to vector<8x128xf32>
    %330 = arith.addf %329, %328 : vector<8x128xf32>
    %331 = arith.divf %329, %330 : vector<8x128xf32>
    %332 = vector.extract_strided_slice %326 {offsets = [0, 64], sizes = [8, 32], strides = [1, 1]} : vector<8x128xf32> to vector<8x32xf32>
    %333 = math.tanh %332 : vector<8x32xf32>
    %334 = vector.extract_strided_slice %331 {offsets = [0, 0], sizes = [8, 32], strides = [1, 1]} : vector<8x128xf32> to vector<8x32xf32>
    %335 = arith.mulf %334, %333 : vector<8x32xf32>
    %336 = vector.extract_strided_slice %331 {offsets = [0, 96], sizes = [8, 32], strides = [1, 1]} : vector<8x128xf32> to vector<8x32xf32>
    %337 = math.tanh %335 : vector<8x32xf32>
    %338 = arith.mulf %336, %337 : vector<8x32xf32>
    %c0_109 = arith.constant 0 : index
    %c0_110 = arith.constant 0 : index
    %339 = vector.load %arg7[%c0_109, %c0_110] : memref<64x64xf32, #tpu.memory_space<vmem>>, vector<32x64xf32>
    %cst_111 = arith.constant dense<0.000000e+00> : vector<8x64xf32>
    %340 = tpu.matmul %325, %339, %cst_111 {dimension_numbers = #tpu.dot_dimension_numbers<[1], [0], [0], [1], [0, 0, 1, 1], [], []>} : vector<8x32xf32>, vector<32x64xf32>, vector<8x64xf32> -> vector<8x64xf32>
    %c32_112 = arith.constant 32 : index
    %c0_113 = arith.constant 0 : index
    %341 = vector.load %arg7[%c32_112, %c0_113] : memref<64x64xf32, #tpu.memory_space<vmem>>, vector<32x64xf32>
    %cst_114 = arith.constant dense<0.000000e+00> : vector<8x64xf32>
    %342 = tpu.matmul %338, %341, %cst_114 {dimension_numbers = #tpu.dot_dimension_numbers<[1], [0], [0], [1], [0, 0, 1, 1], [], []>} : vector<8x32xf32>, vector<32x64xf32>, vector<8x64xf32> -> vector<8x64xf32>
    %343 = arith.addf %340, %342 : vector<8x64xf32>
    %c0_115 = arith.constant 0 : index
    %c0_116 = arith.constant 0 : index
    %344 = vector.load %arg8[%c0_115, %c0_116] : memref<1x64xf32, #tpu.memory_space<vmem>>, vector<1x64xf32>
    %345 = vector.broadcast %344 : vector<1x64xf32> to vector<8x64xf32>
    %346 = arith.addf %343, %345 : vector<8x64xf32>
    %cst_117 = arith.constant 0.000000e+00 : f32
    %347 = vector.broadcast %cst_117 : f32 to vector<8x64xf32>
    %348 = arith.maximumf %346, %347 : vector<8x64xf32>
    %c0_118 = arith.constant 0 : index
    %c0_119 = arith.constant 0 : index
    %349 = vector.load %arg9[%c0_118, %c0_119] : memref<64x32xf32, #tpu.memory_space<vmem>>, vector<64x32xf32>
    %cst_120 = arith.constant dense<0.000000e+00> : vector<8x32xf32>
    %350 = tpu.matmul %348, %349, %cst_120 {dimension_numbers = #tpu.dot_dimension_numbers<[1], [0], [0], [1], [0, 0, 1, 1], [], []>} : vector<8x64xf32>, vector<64x32xf32>, vector<8x32xf32> -> vector<8x32xf32>
    %c0_121 = arith.constant 0 : index
    %c0_122 = arith.constant 0 : index
    %351 = vector.load %arg10[%c0_121, %c0_122] : memref<1x32xf32, #tpu.memory_space<vmem>>, vector<1x32xf32>
    %352 = vector.broadcast %351 : vector<1x32xf32> to vector<8x32xf32>
    %353 = arith.addf %350, %352 : vector<8x32xf32>
    %cst_123 = arith.constant 0.000000e+00 : f32
    %354 = vector.broadcast %cst_123 : f32 to vector<8x32xf32>
    %355 = arith.maximumf %353, %354 : vector<8x32xf32>
    %c0_124 = arith.constant 0 : index
    %c0_125 = arith.constant 0 : index
    %356 = vector.load %arg11[%c0_124, %c0_125] : memref<32x2xf32, #tpu.memory_space<vmem>>, vector<32x2xf32>
    %cst_126 = arith.constant dense<0.000000e+00> : vector<8x2xf32>
    %357 = tpu.matmul %355, %356, %cst_126 {dimension_numbers = #tpu.dot_dimension_numbers<[1], [0], [0], [1], [0, 0, 1, 1], [], []>} : vector<8x32xf32>, vector<32x2xf32>, vector<8x2xf32> -> vector<8x2xf32>
    %c0_127 = arith.constant 0 : index
    %c0_128 = arith.constant 0 : index
    %358 = vector.load %arg12[%c0_127, %c0_128] : memref<1x2xf32, #tpu.memory_space<vmem>>, vector<1x2xf32>
    %359 = vector.broadcast %358 : vector<1x2xf32> to vector<8x2xf32>
    %360 = arith.addf %357, %359 : vector<8x2xf32>
    %361 = vector.extract_strided_slice %360 {offsets = [0, 1], sizes = [8, 1], strides = [1, 1]} : vector<8x2xf32> to vector<8x1xf32>
    %362 = vector.extract_strided_slice %360 {offsets = [0, 0], sizes = [8, 1], strides = [1, 1]} : vector<8x2xf32> to vector<8x1xf32>
    %363 = arith.subf %361, %362 : vector<8x1xf32>
    %364 = arith.negf %363 : vector<8x1xf32>
    %365 = math.exp %364 : vector<8x1xf32>
    %cst_129 = arith.constant 1.000000e+00 : f32
    %366 = vector.broadcast %cst_129 : f32 to vector<8x1xf32>
    %367 = arith.addf %366, %365 : vector<8x1xf32>
    %368 = arith.divf %366, %367 : vector<8x1xf32>
    %cst_130 = arith.constant 1.000000e+00 : f32
    %369 = vector.broadcast %cst_130 : f32 to vector<8x1xf32>
    %370 = arith.subf %369, %368 : vector<8x1xf32>
    %371 = tpu.concatenate %370, %368 in 1 : vector<8x1xf32>, vector<8x1xf32> -> vector<8x2xf32>
    %cst_131 = arith.constant 5.000000e-01 : f32
    %372 = vector.broadcast %cst_131 : f32 to vector<8x2xf32>
    %373 = arith.subf %371, %372 : vector<8x2xf32>
    %cst_132 = arith.constant 1.200000e+00 : f32
    %374 = vector.broadcast %cst_132 : f32 to vector<8x2xf32>
    %375 = arith.mulf %373, %374 : vector<8x2xf32>
    %cst_133 = arith.constant 5.000000e-01 : f32
    %376 = vector.broadcast %cst_133 : f32 to vector<8x2xf32>
    %377 = arith.addf %375, %376 : vector<8x2xf32>
    %cst_134 = arith.constant 0.000000e+00 : f32
    %cst_135 = arith.constant 1.000000e+00 : f32
    %378 = vector.broadcast %cst_134 : f32 to vector<8x2xf32>
    %379 = arith.maximumf %378, %377 : vector<8x2xf32>
    %380 = vector.broadcast %cst_135 : f32 to vector<8x2xf32>
    %381 = arith.minimumf %380, %379 : vector<8x2xf32>
    %c0_136 = arith.constant 0 : index
    %c0_137 = arith.constant 0 : index
    %382 = vector.load %arg13[%c0_136, %c0_137] : memref<8x2xf32, #tpu.memory_space<vmem>>, vector<8x2xf32>
    tpu.vector_store %arg13[%c0_136, %c0_137], %381 {strides = array<i32>} : memref<8x2xf32, #tpu.memory_space<vmem>>, vector<8x2xf32>,
    return
  }
}

</mosaic_0001>

<llo_original>
// kernel: forward.1
$region0: #{forward.1}
  #allocation0 [shape = 'u32[]', space=smem, size = 0x4, offset = 0x4, fixed_abs, tag = 'smem constant byte address 0x4 - core index']
  #allocation1 [shape = 'u32[72,128]{1,0:T(1,128)}', space=vmem, size = 0x9000, scoped, tag = 'internal scratch']
  #allocation2 [shape = 'f32[64,256]{1,0:T(8,128)}', space=vmem, size = 0x10000, scoped, tag = 'scratch operand']
  #allocation3 [shape = 'f32[64,64]{1,0:T(8,128)}', space=vmem, size = 0x8000, scoped, tag = 'scratch operand']
  %s0 = inlined_call_operand.vmem [shape: f32[64,32], index: 0, kind: input, shape index: {}]
  %s1 = inlined_call_operand.vmem [shape: f32[32,256], index: 1, kind: input, shape index: {}]
  %s2 = inlined_call_operand.vmem [shape: f32[1,256], index: 2, kind: input, shape index: {}]
  %s3 = inlined_call_operand.vmem [shape: f32[64,256], index: 3, kind: input, shape index: {}]
  %s4 = inlined_call_operand.vmem [shape: f32[64,256], index: 4, kind: input, shape index: {}]
  %s5 = inlined_call_operand.vmem [shape: f32[1,256], index: 5, kind: input, shape index: {}]
  %s6 = inlined_call_operand.vmem [shape: f32[32,128], index: 6, kind: input, shape index: {}]
  %s7 = inlined_call_operand.vmem [shape: f32[64,64], index: 7, kind: input, shape index: {}]
  %s8 = inlined_call_operand.vmem [shape: f32[1,64], index: 8, kind: input, shape index: {}]
  %s9 = inlined_call_operand.vmem [shape: f32[64,32], index: 9, kind: input, shape index: {}]
  %s10 = inlined_call_operand.vmem [shape: f32[1,32], index: 10, kind: input, shape index: {}]
  %s11 = inlined_call_operand.vmem [shape: f32[32,2], index: 11, kind: input, shape index: {}]
  %s12 = inlined_call_operand.vmem [shape: f32[1,2], index: 12, kind: input, shape index: {}]
  %s13 = inlined_call_operand.vmem [shape: f32[8,2], index: 13, kind: output, shape index: {}]
  %s14 = sld [smem:[#allocation0]]
  $region62: #{forward.1} parent=0
    _
  %s16 = ssub.s32 1, %s14
  %s17 = scalar_select 0, %s16, %s14
  // Predicated region
  $region2: #{forward.1} parent=0 // pred_check
    _
  $region3: #{forward.1} parent=0 // pred_check_branch
    %19 = sbr.rel (0) target = $region5
  $region4: #{forward.1} parent=0 // pred_region
    _
  $region5: #{forward.1} parent=0 // pred_fallthru
    _
  // Predicated region
  $region6: #{forward.1} parent=0 // pred_check
    _
  $region7: #{forward.1} parent=0 // pred_check_branch
    %21 = sbr.rel (0) target = $region9
  $region8: #{forward.1} parent=0 // pred_region
    _
  $region9: #{forward.1} parent=0 // pred_fallthru
    _
  // Predicated region
  $region10: #{forward.1} parent=0 // pred_check
    _
  $region11: #{forward.1} parent=0 // pred_check_branch
    %23 = sbr.rel (0) target = $region13
  $region12: #{forward.1} parent=0 // pred_region
    _
  $region13: #{forward.1} parent=0 // pred_fallthru
    _
  // Predicated region
  $region14: #{forward.1} parent=0 // pred_check
    _
  $region15: #{forward.1} parent=0 // pred_check_branch
    %25 = sbr.rel (0) target = $region17
  $region16: #{forward.1} parent=0 // pred_region
    _
  $region17: #{forward.1} parent=0 // pred_fallthru
    _
  // Predicated region
  $region18: #{forward.1} parent=0 // pred_check
    _
  $region19: #{forward.1} parent=0 // pred_check_branch
    %27 = sbr.rel (0) target = $region21
  $region20: #{forward.1} parent=0 // pred_region
    _
  $region21: #{forward.1} parent=0 // pred_fallthru
    _
  // Predicated region
  $region22: #{forward.1} parent=0 // pred_check
    _
  $region23: #{forward.1} parent=0 // pred_check_branch
    %29 = sbr.rel (0) target = $region25
  $region24: #{forward.1} parent=0 // pred_region
    _
  $region25: #{forward.1} parent=0 // pred_fallthru
    _
  // Predicated region
  $region26: #{forward.1} parent=0 // pred_check
    _
  $region27: #{forward.1} parent=0 // pred_check_branch
    %31 = sbr.rel (0) target = $region29
  $region28: #{forward.1} parent=0 // pred_region
    _
  $region29: #{forward.1} parent=0 // pred_fallthru
    _
  // Predicated region
  $region30: #{forward.1} parent=0 // pred_check
    _
  $region31: #{forward.1} parent=0 // pred_check_branch
    %33 = sbr.rel (0) target = $region33
  $region32: #{forward.1} parent=0 // pred_region
    _
  $region33: #{forward.1} parent=0 // pred_fallthru
    _
  // Predicated region
  $region34: #{forward.1} parent=0 // pred_check
    _
  $region35: #{forward.1} parent=0 // pred_check_branch
    %35 = sbr.rel (0) target = $region37
  $region36: #{forward.1} parent=0 // pred_region
    _
  $region37: #{forward.1} parent=0 // pred_fallthru
    _
  // Predicated region
  $region38: #{forward.1} parent=0 // pred_check
    _
  $region39: #{forward.1} parent=0 // pred_check_branch
    %37 = sbr.rel (0) target = $region41
  $region40: #{forward.1} parent=0 // pred_region
    _
  $region41: #{forward.1} parent=0 // pred_fallthru
    _
  // Predicated region
  $region42: #{forward.1} parent=0 // pred_check
    _
  $region43: #{forward.1} parent=0 // pred_check_branch
    %39 = sbr.rel (0) target = $region45
  $region44: #{forward.1} parent=0 // pred_region
    _
  $region45: #{forward.1} parent=0 // pred_fallthru
    _
  // Predicated region
  $region46: #{forward.1} parent=0 // pred_check
    _
  $region47: #{forward.1} parent=0 // pred_check_branch
    %41 = sbr.rel (0) target = $region49
  $region48: #{forward.1} parent=0 // pred_region
    _
  $region49: #{forward.1} parent=0 // pred_fallthru
    _
  // Predicated region
  $region50: #{forward.1} parent=0 // pred_check
    _
  $region51: #{forward.1} parent=0 // pred_check_branch
    %43 = sbr.rel (0) target = $region53
  $region52: #{forward.1} parent=0 // pred_region
    _
  $region53: #{forward.1} parent=0 // pred_fallthru
    _
  %v44 = vld [vmem:[%s0] sm:$0xff]
  %v45 = vld [vmem:[%s0 + $0x8] sm:$0xff]
  %v46 = vld [vmem:[%s0 + $0x10] sm:$0xff]
  %v47 = vld [vmem:[%s0 + $0x18] sm:$0xff]
  %v48 = vld [vmem:[%s0 + $0x20] sm:$0xff]
  %v49 = vld [vmem:[%s0 + $0x28] sm:$0xff]
  %v50 = vld [vmem:[%s0 + $0x30] sm:$0xff]
  %v51 = vld [vmem:[%s0 + $0x38] sm:$0xff]
  %v52 = vld [vmem:[%s1] sm:$0xff]
  %v53 = vld [vmem:[%s1 + $0x8] sm:$0xff]
  %v54 = vld [vmem:[%s1 + $0x10] sm:$0xff]
  %v55 = vld [vmem:[%s1 + $0x18] sm:$0xff]
  %v56 = vld [vmem:[%s1 + $0x20] sm:$0xff]
  %v57 = vld [vmem:[%s1 + $0x28] sm:$0xff]
  %v58 = vld [vmem:[%s1 + $0x30] sm:$0xff]
  %v59 = vld [vmem:[%s1 + $0x38] sm:$0xff]
  %v60 = vld [vmem:[%s2] sm:$0x3]
  %v62 = vperm.slane %v60, 0
  %v63 = vperm.slane %v60, 1
  %vm66 = vcmask 261120
  %v68 = vsel %vm66, %v44, 0
  %v71 = vsel %vm66, %v45, 0
  %v74 = vsel %vm66, %v46, 0
  %v77 = vsel %vm66, %v47, 0
  %v80 = vsel %vm66, %v48, 0
  %v83 = vsel %vm66, %v49, 0
  %v86 = vsel %vm66, %v50, 0
  %v89 = vsel %vm66, %v51, 0
  %91 = vmatpush.msra.mxu0 0.0
  %92 = vmatpush.msra.mxu0 0.0
  %93 = vmatpush.msra.mxu0 0.0
  %94 = vmatpush.msra.mxu0 0.0
  %95 = vmatpush.msra.mxu0 0.0
  %96 = vmatpush.msra.mxu0 0.0
  %97 = vmatpush.msra.mxu0 0.0
  %98 = vmatpush.msra.mxu0 0.0
  %99 = vmatpush.msra.mxu0 0.0
  %100 = vmatpush.msra.mxu0 0.0
  %101 = vmatpush.msra.mxu0 0.0
  %102 = vmatpush.msra.mxu0 0.0
  %103 = vmatpush.msra.mxu0 %v58
  %104 = vmatpush.msra.mxu0 %v56
  %105 = vmatpush.msra.mxu0 %v54
  %106 = vmatpush.msra.mxu0 %v52
  %107 = vmatmul.f32.gmra.mxu0 %v68
  %v108 = vpop.f32.mrf.mxu0
  %v109 = vadd.f32 %v62, %v108
  %110 = vmatmul.f32.gmra.mxu0 %v71
  %v111 = vpop.f32.mrf.mxu0
  %v112 = vadd.f32 %v62, %v111
  %113 = vmatmul.f32.gmra.mxu0 %v74
  %v114 = vpop.f32.mrf.mxu0
  %v115 = vadd.f32 %v62, %v114
  %116 = vmatmul.f32.gmra.mxu0 %v77
  %v117 = vpop.f32.mrf.mxu0
  %v118 = vadd.f32 %v62, %v117
  %119 = vmatmul.f32.gmra.mxu0 %v80
  %v120 = vpop.f32.mrf.mxu0
  %v121 = vadd.f32 %v62, %v120
  %122 = vmatmul.f32.gmra.mxu0 %v83
  %v123 = vpop.f32.mrf.mxu0
  %v124 = vadd.f32 %v62, %v123
  %125 = vmatmul.f32.gmra.mxu0 %v86
  %v126 = vpop.f32.mrf.mxu0
  %v127 = vadd.f32 %v62, %v126
  %128 = vmatmul.f32.gmra.mxu0 %v89
  %v129 = vpop.f32.mrf.mxu0
  %v130 = vadd.f32 %v62, %v129
  %131 = vdwg.mxu0
  %132 = vmatpush.msra.mxu0 0.0
  %133 = vmatpush.msra.mxu0 0.0
  %134 = vmatpush.msra.mxu0 0.0
  %135 = vmatpush.msra.mxu0 0.0
  %136 = vmatpush.msra.mxu0 0.0
  %137 = vmatpush.msra.mxu0 0.0
  %138 = vmatpush.msra.mxu0 0.0
  %139 = vmatpush.msra.mxu0 0.0
  %140 = vmatpush.msra.mxu0 0.0
  %141 = vmatpush.msra.mxu0 0.0
  %142 = vmatpush.msra.mxu0 0.0
  %143 = vmatpush.msra.mxu0 0.0
  %144 = vmatpush.msra.mxu0 %v59
  %145 = vmatpush.msra.mxu0 %v57
  %146 = vmatpush.msra.mxu0 %v55
  %147 = vmatpush.msra.mxu0 %v53
  %148 = vmatmul.f32.gmra.mxu0 %v68
  %v149 = vpop.f32.mrf.mxu0
  %v150 = vadd.f32 %v63, %v149
  %151 = vmatmul.f32.gmra.mxu0 %v71
  %v152 = vpop.f32.mrf.mxu0
  %v153 = vadd.f32 %v63, %v152
  %154 = vmatmul.f32.gmra.mxu0 %v74
  %v155 = vpop.f32.mrf.mxu0
  %v156 = vadd.f32 %v63, %v155
  %157 = vmatmul.f32.gmra.mxu0 %v77
  %v158 = vpop.f32.mrf.mxu0
  %v159 = vadd.f32 %v63, %v158
  %160 = vmatmul.f32.gmra.mxu0 %v80
  %v161 = vpop.f32.mrf.mxu0
  %v162 = vadd.f32 %v63, %v161
  %163 = vmatmul.f32.gmra.mxu0 %v83
  %v164 = vpop.f32.mrf.mxu0
  %v165 = vadd.f32 %v63, %v164
  %166 = vmatmul.f32.gmra.mxu0 %v86
  %v167 = vpop.f32.mrf.mxu0
  %v168 = vadd.f32 %v63, %v167
  %169 = vmatmul.f32.gmra.mxu0 %v89
  %v170 = vpop.f32.mrf.mxu0
  %v171 = vadd.f32 %v63, %v170
  %172 = vdwg.mxu0
  %173 = vst [vmem:[#allocation2] sm:$0xff] %v109
  %174 = vst [vmem:[#allocation2 + $0x8] sm:$0xff] %v150
  %175 = vst [vmem:[#allocation2 + $0x10] sm:$0xff] %v112
  %176 = vst [vmem:[#allocation2 + $0x18] sm:$0xff] %v153
  %177 = vst [vmem:[#allocation2 + $0x20] sm:$0xff] %v115
  %178 = vst [vmem:[#allocation2 + $0x28] sm:$0xff] %v156
  %179 = vst [vmem:[#allocation2 + $0x30] sm:$0xff] %v118
  %180 = vst [vmem:[#allocation2 + $0x38] sm:$0xff] %v159
  %181 = vst [vmem:[#allocation2 + $0x40] sm:$0xff] %v121
  %182 = vst [vmem:[#allocation2 + $0x48] sm:$0xff] %v162
  %183 = vst [vmem:[#allocation2 + $0x50] sm:$0xff] %v124
  %184 = vst [vmem:[#allocation2 + $0x58] sm:$0xff] %v165
  %185 = vst [vmem:[#allocation2 + $0x60] sm:$0xff] %v127
  %186 = vst [vmem:[#allocation2 + $0x68] sm:$0xff] %v168
  %187 = vst [vmem:[#allocation2 + $0x70] sm:$0xff] %v130
  %188 = vst [vmem:[#allocation2 + $0x78] sm:$0xff] %v171
  %v189 = vld [vmem:[%s3] sm:$0xff]
  %v190 = vld [vmem:[%s3 + $0x8] sm:$0xff]
  %v191 = vld [vmem:[%s3 + $0x10] sm:$0xff]
  %v192 = vld [vmem:[%s3 + $0x18] sm:$0xff]
  %v193 = vld [vmem:[%s3 + $0x20] sm:$0xff]
  %v194 = vld [vmem:[%s3 + $0x28] sm:$0xff]
  %v195 = vld [vmem:[%s3 + $0x30] sm:$0xff]
  %v196 = vld [vmem:[%s3 + $0x38] sm:$0xff]
  %v197 = vld [vmem:[%s3 + $0x40] sm:$0xff]
  %v198 = vld [vmem:[%s3 + $0x48] sm:$0xff]
  %v199 = vld [vmem:[%s3 + $0x50] sm:$0xff]
  %v200 = vld [vmem:[%s3 + $0x58] sm:$0xff]
  %v201 = vld [vmem:[%s3 + $0x60] sm:$0xff]
  %v202 = vld [vmem:[%s3 + $0x68] sm:$0xff]
  %v203 = vld [vmem:[%s3 + $0x70] sm:$0xff]
  %v204 = vld [vmem:[%s3 + $0x78] sm:$0xff]
  %v205 = vld [vmem:[#allocation2] sm:$0xff]
  %v206 = vld [vmem:[#allocation2 + $0x8] sm:$0xff]
  %v207 = vxor.u32 %v205, 2147483648
  %v208 = vxor.u32 %v206, 2147483648
  %v209 = vmul.f32 %v207, 1.442695
  %v210 = vpow.pop %v209
  %v211 = vmul.f32 %v208, 1.442695
  %v212 = vpow.pop %v211
  %v213 = vadd.f32 %v210, 1.0
  %v214 = vadd.f32 %v212, 1.0
  %v215 = vrcp.pop %v213
  %v216 = vmul.f32 %v213, %v215
  %v217 = vsub.f32 1.0, %v216
  %v218 = vmul.f32 %v215, %v217
  %v219 = vadd.f32 %v215, %v218
  %vm220 = vweird.f32 %v213
  %vm221 = vweird.f32 %v215
  %vm222 = vmor %vm220, %vm221
  %v223 = vsel %vm222, %v215, %v219
  %v224 = vand.u32 2147483647, %v213
  %vm225 = vcmp.eq.f32.partialorder %v224, 8.507059e+37
  %v226 = vand.u32 %v213, 2147483648
  %v227 = vor.u32 1.1754944e-38, %v226
  %v228 = vsel %vm225, %v227, %v223
  %v229 = vmul.f32 1.0, %v228
  %v230 = vrcp.pop %v214
  %v231 = vmul.f32 %v214, %v230
  %v232 = vsub.f32 1.0, %v231
  %v233 = vmul.f32 %v230, %v232
  %v234 = vadd.f32 %v230, %v233
  %vm235 = vweird.f32 %v214
  %vm236 = vweird.f32 %v230
  %vm237 = vmor %vm235, %vm236
  %v238 = vsel %vm237, %v230, %v234
  %v239 = vand.u32 2147483647, %v214
  %vm240 = vcmp.eq.f32.partialorder %v239, 8.507059e+37
  %v241 = vand.u32 %v214, 2147483648
  %v242 = vor.u32 1.1754944e-38, %v241
  %v243 = vsel %vm240, %v242, %v238
  %v244 = vmul.f32 1.0, %v243
  %v245 = vtanh.pop %v206
  %v246 = vmul.f32 %v229, %v245
  %v247 = vtanh.pop %v246
  %249 = vrot.lane.b32.xlu0 %v247, 64
  %v250 = vpop.permute.xlu0 %249
  %v252 = vmul.f32 %v244, %v250
  %254 = vrot.lane.b32.xlu0 %v252, 64
  %v255 = vpop.permute.xlu0 %254
  %257 = vst.msk [vmem:[#allocation3] sm:$0xff] %vm66, %v255
  %vm258 = vcmask 523520
  %259 = vst.msk [vmem:[#allocation3 + $0x38] sm:$0xff] %vm258, %v255
  %v260 = vld [vmem:[#allocation2 + $0x10] sm:$0xff]
  %v261 = vld [vmem:[#allocation2 + $0x18] sm:$0xff]
  %vm262 = vcmask 523264
  %v263 = vsel %vm262, %v255, 0
  %265 = vmatpush.msra.mxu0 0.0
  %266 = vmatpush.msra.mxu0 0.0
  %267 = vmatpush.msra.mxu0 0.0
  %268 = vmatpush.msra.mxu0 0.0
  %269 = vmatpush.msra.mxu0 0.0
  %270 = vmatpush.msra.mxu0 0.0
  %271 = vmatpush.msra.mxu0 0.0
  %272 = vmatpush.msra.mxu0 0.0
  %273 = vmatpush.msra.mxu0 %v203
  %274 = vmatpush.msra.mxu0 %v201
  %275 = vmatpush.msra.mxu0 %v199
  %276 = vmatpush.msra.mxu0 %v197
  %277 = vmatpush.msra.mxu0 %v195
  %278 = vmatpush.msra.mxu0 %v193
  %279 = vmatpush.msra.mxu0 %v191
  %280 = vmatpush.msra.mxu0 %v189
  %281 = vmatmul.f32.gmra.mxu0 %v263
  %v282 = vpop.f32.mrf.mxu0
  %v283 = vadd.f32 0.0, %v282
  %284 = vdwg.mxu0
  %285 = vmatpush.msra.mxu0 0.0
  %286 = vmatpush.msra.mxu0 0.0
  %287 = vmatpush.msra.mxu0 0.0
  %288 = vmatpush.msra.mxu0 0.0
  %289 = vmatpush.msra.mxu0 0.0
  %290 = vmatpush.msra.mxu0 0.0
  %291 = vmatpush.msra.mxu0 0.0
  %292 = vmatpush.msra.mxu0 0.0
  %293 = vmatpush.msra.mxu0 %v204
  %294 = vmatpush.msra.mxu0 %v202
  %295 = vmatpush.msra.mxu0 %v200
  %296 = vmatpush.msra.mxu0 %v198
  %297 = vmatpush.msra.mxu0 %v196
  %298 = vmatpush.msra.mxu0 %v194
  %299 = vmatpush.msra.mxu0 %v192
  %300 = vmatpush.msra.mxu0 %v190
  %301 = vmatmul.f32.gmra.mxu0 %v263
  %v302 = vpop.f32.mrf.mxu0
  %v303 = vadd.f32 0.0, %v302
  %304 = vdwg.mxu0
  %v305 = vadd.f32 %v260, %v283
  %v306 = vadd.f32 %v261, %v303
  %v307 = vxor.u32 %v305, 2147483648
  %v308 = vxor.u32 %v306, 2147483648
  %v309 = vmul.f32 %v307, 1.442695
  %v310 = vpow.pop %v309
  %v311 = vmul.f32 %v308, 1.442695
  %v312 = vpow.pop %v311
  %v313 = vadd.f32 %v310, 1.0
  %v314 = vadd.f32 %v312, 1.0
  %v315 = vrcp.pop %v313
  %v316 = vmul.f32 %v313, %v315
  %v317 = vsub.f32 1.0, %v316
  %v318 = vmul.f32 %v315, %v317
  %v319 = vadd.f32 %v315, %v318
  %vm320 = vweird.f32 %v313
  %vm321 = vweird.f32 %v315
  %vm322 = vmor %vm320, %vm321
  %v323 = vsel %vm322, %v315, %v319
  %v324 = vand.u32 2147483647, %v313
  %vm325 = vcmp.eq.f32.partialorder %v324, 8.507059e+37
  %v326 = vand.u32 %v313, 2147483648
  %v327 = vor.u32 1.1754944e-38, %v326
  %v328 = vsel %vm325, %v327, %v323
  %v329 = vmul.f32 1.0, %v328
  %v330 = vrcp.pop %v314
  %v331 = vmul.f32 %v314, %v330
  %v332 = vsub.f32 1.0, %v331
  %v333 = vmul.f32 %v330, %v332
  %v334 = vadd.f32 %v330, %v333
  %vm335 = vweird.f32 %v314
  %vm336 = vweird.f32 %v330
  %vm337 = vmor %vm335, %vm336
  %v338 = vsel %vm337, %v330, %v334
  %v339 = vand.u32 2147483647, %v314
  %vm340 = vcmp.eq.f32.partialorder %v339, 8.507059e+37
  %v341 = vand.u32 %v314, 2147483648
  %v342 = vor.u32 1.1754944e-38, %v341
  %v343 = vsel %vm340, %v342, %v338
  %v344 = vmul.f32 1.0, %v343
  %v345 = vtanh.pop %v306
  %347 = vrot.lane.b32.xlu0 %v246, 64
  %v348 = vpop.permute.xlu0 %347
  %v350 = vmul.f32 %v329, %v348
  %v351 = vmul.f32 %v329, %v345
  %353 = vrot.lane.b32.xlu0 %v351, 64
  %v354 = vpop.permute.xlu0 %353
  %v356 = vadd.f32 %v350, %v354
  %v357 = vtanh.pop %v356
  %v358 = vmul.f32 %v344, %v357
  %360 = vrot.lane.b32.xlu0 %v358, 64
  %v361 = vpop.permute.xlu0 %360
  %363 = vst.msk [vmem:[#allocation3 + $0x8] sm:$0xff] %vm66, %v361
  %364 = vst.msk [vmem:[#allocation3 + $0x30] sm:$0xff] %vm258, %v361
  %v365 = vld [vmem:[#allocation2 + $0x20] sm:$0xff]
  %v366 = vld [vmem:[#allocation2 + $0x28] sm:$0xff]
  %v367 = vsel %vm262, %v361, 0
  %369 = vmatpush.msra.mxu0 0.0
  %370 = vmatpush.msra.mxu0 0.0
  %371 = vmatpush.msra.mxu0 0.0
  %372 = vmatpush.msra.mxu0 0.0
  %373 = vmatpush.msra.mxu0 0.0
  %374 = vmatpush.msra.mxu0 0.0
  %375 = vmatpush.msra.mxu0 0.0
  %376 = vmatpush.msra.mxu0 0.0
  %377 = vmatpush.msra.mxu0 %v203
  %378 = vmatpush.msra.mxu0 %v201
  %379 = vmatpush.msra.mxu0 %v199
  %380 = vmatpush.msra.mxu0 %v197
  %381 = vmatpush.msra.mxu0 %v195
  %382 = vmatpush.msra.mxu0 %v193
  %383 = vmatpush.msra.mxu0 %v191
  %384 = vmatpush.msra.mxu0 %v189
  %385 = vmatmul.f32.gmra.mxu0 %v367
  %v386 = vpop.f32.mrf.mxu0
  %v387 = vadd.f32 0.0, %v386
  %388 = vdwg.mxu0
  %389 = vmatpush.msra.mxu0 0.0
  %390 = vmatpush.msra.mxu0 0.0
  %391 = vmatpush.msra.mxu0 0.0
  %392 = vmatpush.msra.mxu0 0.0
  %393 = vmatpush.msra.mxu0 0.0
  %394 = vmatpush.msra.mxu0 0.0
  %395 = vmatpush.msra.mxu0 0.0
  %396 = vmatpush.msra.mxu0 0.0
  %397 = vmatpush.msra.mxu0 %v204
  %398 = vmatpush.msra.mxu0 %v202
  %399 = vmatpush.msra.mxu0 %v200
  %400 = vmatpush.msra.mxu0 %v198
  %401 = vmatpush.msra.mxu0 %v196
  %402 = vmatpush.msra.mxu0 %v194
  %403 = vmatpush.msra.mxu0 %v192
  %404 = vmatpush.msra.mxu0 %v190
  %405 = vmatmul.f32.gmra.mxu0 %v367
  %v406 = vpop.f32.mrf.mxu0
  %v407 = vadd.f32 0.0, %v406
  %408 = vdwg.mxu0
  %v409 = vadd.f32 %v365, %v387
  %v410 = vadd.f32 %v366, %v407
  %v411 = vxor.u32 %v409, 2147483648
  %v412 = vxor.u32 %v410, 2147483648
  %v413 = vmul.f32 %v411, 1.442695
  %v414 = vpow.pop %v413
  %v415 = vmul.f32 %v412, 1.442695
  %v416 = vpow.pop %v415
  %v417 = vadd.f32 %v414, 1.0
  %v418 = vadd.f32 %v416, 1.0
  %v419 = vrcp.pop %v417
  %v420 = vmul.f32 %v417, %v419
  %v421 = vsub.f32 1.0, %v420
  %v422 = vmul.f32 %v419, %v421
  %v423 = vadd.f32 %v419, %v422
  %vm424 = vweird.f32 %v417
  %vm425 = vweird.f32 %v419
  %vm426 = vmor %vm424, %vm425
  %v427 = vsel %vm426, %v419, %v423
  %v428 = vand.u32 2147483647, %v417
  %vm429 = vcmp.eq.f32.partialorder %v428, 8.507059e+37
  %v430 = vand.u32 %v417, 2147483648
  %v431 = vor.u32 1.1754944e-38, %v430
  %v432 = vsel %vm429, %v431, %v427
  %v433 = vmul.f32 1.0, %v432
  %v434 = vrcp.pop %v418
  %v435 = vmul.f32 %v418, %v434
  %v436 = vsub.f32 1.0, %v435
  %v437 = vmul.f32 %v434, %v436
  %v438 = vadd.f32 %v434, %v437
  %vm439 = vweird.f32 %v418
  %vm440 = vweird.f32 %v434
  %vm441 = vmor %vm439, %vm440
  %v442 = vsel %vm441, %v434, %v438
  %v443 = vand.u32 2147483647, %v418
  %vm444 = vcmp.eq.f32.partialorder %v443, 8.507059e+37
  %v445 = vand.u32 %v418, 2147483648
  %v446 = vor.u32 1.1754944e-38, %v445
  %v447 = vsel %vm444, %v446, %v442
  %v448 = vmul.f32 1.0, %v447
  %v449 = vtanh.pop %v410
  %v450 = vmul.f32 %v433, %v356
  %v451 = vmul.f32 %v433, %v449
  %453 = vrot.lane.b32.xlu0 %v451, 64
  %v454 = vpop.permute.xlu0 %453
  %v456 = vadd.f32 %v450, %v454
  %v457 = vtanh.pop %v456
  %v458 = vmul.f32 %v448, %v457
  %460 = vrot.lane.b32.xlu0 %v458, 64
  %v461 = vpop.permute.xlu0 %460
  %463 = vst.msk [vmem:[#allocation3 + $0x10] sm:$0xff] %vm66, %v461
  %464 = vst.msk [vmem:[#allocation3 + $0x28] sm:$0xff] %vm258, %v461
  %v465 = vld [vmem:[#allocation2 + $0x30] sm:$0xff]
  %v466 = vld [vmem:[#allocation2 + $0x38] sm:$0xff]
  %v467 = vsel %vm262, %v461, 0
  %469 = vmatpush.msra.mxu0 0.0
  %470 = vmatpush.msra.mxu0 0.0
  %471 = vmatpush.msra.mxu0 0.0
  %472 = vmatpush.msra.mxu0 0.0
  %473 = vmatpush.msra.mxu0 0.0
  %474 = vmatpush.msra.mxu0 0.0
  %475 = vmatpush.msra.mxu0 0.0
  %476 = vmatpush.msra.mxu0 0.0
  %477 = vmatpush.msra.mxu0 %v203
  %478 = vmatpush.msra.mxu0 %v201
  %479 = vmatpush.msra.mxu0 %v199
  %480 = vmatpush.msra.mxu0 %v197
  %481 = vmatpush.msra.mxu0 %v195
  %482 = vmatpush.msra.mxu0 %v193
  %483 = vmatpush.msra.mxu0 %v191
  %484 = vmatpush.msra.mxu0 %v189
  %485 = vmatmul.f32.gmra.mxu0 %v467
  %v486 = vpop.f32.mrf.mxu0
  %v487 = vadd.f32 0.0, %v486
  %488 = vdwg.mxu0
  %489 = vmatpush.msra.mxu0 0.0
  %490 = vmatpush.msra.mxu0 0.0
  %491 = vmatpush.msra.mxu0 0.0
  %492 = vmatpush.msra.mxu0 0.0
  %493 = vmatpush.msra.mxu0 0.0
  %494 = vmatpush.msra.mxu0 0.0
  %495 = vmatpush.msra.mxu0 0.0
  %496 = vmatpush.msra.mxu0 0.0
  %497 = vmatpush.msra.mxu0 %v204
  %498 = vmatpush.msra.mxu0 %v202
  %499 = vmatpush.msra.mxu0 %v200
  %500 = vmatpush.msra.mxu0 %v198
  %501 = vmatpush.msra.mxu0 %v196
  %502 = vmatpush.msra.mxu0 %v194
  %503 = vmatpush.msra.mxu0 %v192
  %504 = vmatpush.msra.mxu0 %v190
  %505 = vmatmul.f32.gmra.mxu0 %v467
  %v506 = vpop.f32.mrf.mxu0
  %v507 = vadd.f32 0.0, %v506
  %508 = vdwg.mxu0
  %v509 = vadd.f32 %v465, %v487
  %v510 = vadd.f32 %v466, %v507
  %v511 = vxor.u32 %v509, 2147483648
  %v512 = vxor.u32 %v510, 2147483648
  %v513 = vmul.f32 %v511, 1.442695
  %v514 = vpow.pop %v513
  %v515 = vmul.f32 %v512, 1.442695
  %v516 = vpow.pop %v515
  %v517 = vadd.f32 %v514, 1.0
  %v518 = vadd.f32 %v516, 1.0
  %v519 = vrcp.pop %v517
  %v520 = vmul.f32 %v517, %v519
  %v521 = vsub.f32 1.0, %v520
  %v522 = vmul.f32 %v519, %v521
  %v523 = vadd.f32 %v519, %v522
  %vm524 = vweird.f32 %v517
  %vm525 = vweird.f32 %v519
  %vm526 = vmor %vm524, %vm525
  %v527 = vsel %vm526, %v519, %v523
  %v528 = vand.u32 2147483647, %v517
  %vm529 = vcmp.eq.f32.partialorder %v528, 8.507059e+37
  %v530 = vand.u32 %v517, 2147483648
  %v531 = vor.u32 1.1754944e-38, %v530
  %v532 = vsel %vm529, %v531, %v527
  %v533 = vmul.f32 1.0, %v532
  %v534 = vrcp.pop %v518
  %v535 = vmul.f32 %v518, %v534
  %v536 = vsub.f32 1.0, %v535
  %v537 = vmul.f32 %v534, %v536
  %v538 = vadd.f32 %v534, %v537
  %vm539 = vweird.f32 %v518
  %vm540 = vweird.f32 %v534
  %vm541 = vmor %vm539, %vm540
  %v542 = vsel %vm541, %v534, %v538
  %v543 = vand.u32 2147483647, %v518
  %vm544 = vcmp.eq.f32.partialorder %v543, 8.507059e+37
  %v545 = vand.u32 %v518, 2147483648
  %v546 = vor.u32 1.1754944e-38, %v545
  %v547 = vsel %vm544, %v546, %v542
  %v548 = vmul.f32 1.0, %v547
  %v549 = vtanh.pop %v510
  %v550 = vmul.f32 %v533, %v456
  %v551 = vmul.f32 %v533, %v549
  %553 = vrot.lane.b32.xlu0 %v551, 64
  %v554 = vpop.permute.xlu0 %553
  %v556 = vadd.f32 %v550, %v554
  %v557 = vtanh.pop %v556
  %v558 = vmul.f32 %v548, %v557
  %560 = vrot.lane.b32.xlu0 %v558, 64
  %v561 = vpop.permute.xlu0 %560
  %563 = vst.msk [vmem:[#allocation3 + $0x18] sm:$0xff] %vm66, %v561
  %564 = vst.msk [vmem:[#allocation3 + $0x20] sm:$0xff] %vm258, %v561
  %v565 = vld [vmem:[#allocation2 + $0x40] sm:$0xff]
  %v566 = vld [vmem:[#allocation2 + $0x48] sm:$0xff]
  %v567 = vsel %vm262, %v561, 0
  %569 = vmatpush.msra.mxu0 0.0
  %570 = vmatpush.msra.mxu0 0.0
  %571 = vmatpush.msra.mxu0 0.0
  %572 = vmatpush.msra.mxu0 0.0
  %573 = vmatpush.msra.mxu0 0.0
  %574 = vmatpush.msra.mxu0 0.0
  %575 = vmatpush.msra.mxu0 0.0
  %576 = vmatpush.msra.mxu0 0.0
  %577 = vmatpush.msra.mxu0 %v203
  %578 = vmatpush.msra.mxu0 %v201
  %579 = vmatpush.msra.mxu0 %v199
  %580 = vmatpush.msra.mxu0 %v197
  %581 = vmatpush.msra.mxu0 %v195
  %582 = vmatpush.msra.mxu0 %v193
  %583 = vmatpush.msra.mxu0 %v191
  %584 = vmatpush.msra.mxu0 %v189
  %585 = vmatmul.f32.gmra.mxu0 %v567
  %v586 = vpop.f32.mrf.mxu0
  %v587 = vadd.f32 0.0, %v586
  %588 = vdwg.mxu0
  %589 = vmatpush.msra.mxu0 0.0
  %590 = vmatpush.msra.mxu0 0.0
  %591 = vmatpush.msra.mxu0 0.0
  %592 = vmatpush.msra.mxu0 0.0
  %593 = vmatpush.msra.mxu0 0.0
  %594 = vmatpush.msra.mxu0 0.0
  %595 = vmatpush.msra.mxu0 0.0
  %596 = vmatpush.msra.mxu0 0.0
  %597 = vmatpush.msra.mxu0 %v204
  %598 = vmatpush.msra.mxu0 %v202
  %599 = vmatpush.msra.mxu0 %v200
  %600 = vmatpush.msra.mxu0 %v198
  %601 = vmatpush.msra.mxu0 %v196
  %602 = vmatpush.msra.mxu0 %v194
  %603 = vmatpush.msra.mxu0 %v192
  %604 = vmatpush.msra.mxu0 %v190
  %605 = vmatmul.f32.gmra.mxu0 %v567
  %v606 = vpop.f32.mrf.mxu0
  %v607 = vadd.f32 0.0, %v606
  %608 = vdwg.mxu0
  %v609 = vadd.f32 %v565, %v587
  %v610 = vadd.f32 %v566, %v607
  %v611 = vxor.u32 %v609, 2147483648
  %v612 = vxor.u32 %v610, 2147483648
  %v613 = vmul.f32 %v611, 1.442695
  %v614 = vpow.pop %v613
  %v615 = vmul.f32 %v612, 1.442695
  %v616 = vpow.pop %v615
  %v617 = vadd.f32 %v614, 1.0
  %v618 = vadd.f32 %v616, 1.0
  %v619 = vrcp.pop %v617
  %v620 = vmul.f32 %v617, %v619
  %v621 = vsub.f32 1.0, %v620
  %v622 = vmul.f32 %v619, %v621
  %v623 = vadd.f32 %v619, %v622
  %vm624 = vweird.f32 %v617
  %vm625 = vweird.f32 %v619
  %vm626 = vmor %vm624, %vm625
  %v627 = vsel %vm626, %v619, %v623
  %v628 = vand.u32 2147483647, %v617
  %vm629 = vcmp.eq.f32.partialorder %v628, 8.507059e+37
  %v630 = vand.u32 %v617, 2147483648
  %v631 = vor.u32 1.1754944e-38, %v630
  %v632 = vsel %vm629, %v631, %v627
  %v633 = vmul.f32 1.0, %v632
  %v634 = vrcp.pop %v618
  %v635 = vmul.f32 %v618, %v634
  %v636 = vsub.f32 1.0, %v635
  %v637 = vmul.f32 %v634, %v636
  %v638 = vadd.f32 %v634, %v637
  %vm639 = vweird.f32 %v618
  %vm640 = vweird.f32 %v634
  %vm641 = vmor %vm639, %vm640
  %v642 = vsel %vm641, %v634, %v638
  %v643 = vand.u32 2147483647, %v618
  %vm644 = vcmp.eq.f32.partialorder %v643, 8.507059e+37
  %v645 = vand.u32 %v618, 2147483648
  %v646 = vor.u32 1.1754944e-38, %v645
  %v647 = vsel %vm644, %v646, %v642
  %v648 = vmul.f32 1.0, %v647
  %v649 = vtanh.pop %v610
  %v650 = vmul.f32 %v633, %v556
  %v651 = vmul.f32 %v633, %v649
  %653 = vrot.lane.b32.xlu0 %v651, 64
  %v654 = vpop.permute.xlu0 %653
  %v656 = vadd.f32 %v650, %v654
  %v657 = vtanh.pop %v656
  %v658 = vmul.f32 %v648, %v657
  %660 = vrot.lane.b32.xlu0 %v658, 64
  %v661 = vpop.permute.xlu0 %660
  %663 = vst.msk [vmem:[#allocation3 + $0x20] sm:$0xff] %vm66, %v661
  %664 = vst.msk [vmem:[#allocation3 + $0x18] sm:$0xff] %vm258, %v661
  %v665 = vld [vmem:[#allocation2 + $0x50] sm:$0xff]
  %v666 = vld [vmem:[#allocation2 + $0x58] sm:$0xff]
  %v667 = vsel %vm262, %v661, 0
  %669 = vmatpush.msra.mxu0 0.0
  %670 = vmatpush.msra.mxu0 0.0
  %671 = vmatpush.msra.mxu0 0.0
  %672 = vmatpush.msra.mxu0 0.0
  %673 = vmatpush.msra.mxu0 0.0
  %674 = vmatpush.msra.mxu0 0.0
  %675 = vmatpush.msra.mxu0 0.0
  %676 = vmatpush.msra.mxu0 0.0
  %677 = vmatpush.msra.mxu0 %v203
  %678 = vmatpush.msra.mxu0 %v201
  %679 = vmatpush.msra.mxu0 %v199
  %680 = vmatpush.msra.mxu0 %v197
  %681 = vmatpush.msra.mxu0 %v195
  %682 = vmatpush.msra.mxu0 %v193
  %683 = vmatpush.msra.mxu0 %v191
  %684 = vmatpush.msra.mxu0 %v189
  %685 = vmatmul.f32.gmra.mxu0 %v667
  %v686 = vpop.f32.mrf.mxu0
  %v687 = vadd.f32 0.0, %v686
  %688 = vdwg.mxu0
  %689 = vmatpush.msra.mxu0 0.0
  %690 = vmatpush.msra.mxu0 0.0
  %691 = vmatpush.msra.mxu0 0.0
  %692 = vmatpush.msra.mxu0 0.0
  %693 = vmatpush.msra.mxu0 0.0
  %694 = vmatpush.msra.mxu0 0.0
  %695 = vmatpush.msra.mxu0 0.0
  %696 = vmatpush.msra.mxu0 0.0
  %697 = vmatpush.msra.mxu0 %v204
  %698 = vmatpush.msra.mxu0 %v202
  %699 = vmatpush.msra.mxu0 %v200
  %700 = vmatpush.msra.mxu0 %v198
  %701 = vmatpush.msra.mxu0 %v196
  %702 = vmatpush.msra.mxu0 %v194
  %703 = vmatpush.msra.mxu0 %v192
  %704 = vmatpush.msra.mxu0 %v190
  %705 = vmatmul.f32.gmra.mxu0 %v667
  %v706 = vpop.f32.mrf.mxu0
  %v707 = vadd.f32 0.0, %v706
  %708 = vdwg.mxu0
  %v709 = vadd.f32 %v665, %v687
  %v710 = vadd.f32 %v666, %v707
  %v711 = vxor.u32 %v709, 2147483648
  %v712 = vxor.u32 %v710, 2147483648
  %v713 = vmul.f32 %v711, 1.442695
  %v714 = vpow.pop %v713
  %v715 = vmul.f32 %v712, 1.442695
  %v716 = vpow.pop %v715
  %v717 = vadd.f32 %v714, 1.0
  %v718 = vadd.f32 %v716, 1.0
  %v719 = vrcp.pop %v717
  %v720 = vmul.f32 %v717, %v719
  %v721 = vsub.f32 1.0, %v720
  %v722 = vmul.f32 %v719, %v721
  %v723 = vadd.f32 %v719, %v722
  %vm724 = vweird.f32 %v717
  %vm725 = vweird.f32 %v719
  %vm726 = vmor %vm724, %vm725
  %v727 = vsel %vm726, %v719, %v723
  %v728 = vand.u32 2147483647, %v717
  %vm729 = vcmp.eq.f32.partialorder %v728, 8.507059e+37
  %v730 = vand.u32 %v717, 2147483648
  %v731 = vor.u32 1.1754944e-38, %v730
  %v732 = vsel %vm729, %v731, %v727
  %v733 = vmul.f32 1.0, %v732
  %v734 = vrcp.pop %v718
  %v735 = vmul.f32 %v718, %v734
  %v736 = vsub.f32 1.0, %v735
  %v737 = vmul.f32 %v734, %v736
  %v738 = vadd.f32 %v734, %v737
  %vm739 = vweird.f32 %v718
  %vm740 = vweird.f32 %v734
  %vm741 = vmor %vm739, %vm740
  %v742 = vsel %vm741, %v734, %v738
  %v743 = vand.u32 2147483647, %v718
  %vm744 = vcmp.eq.f32.partialorder %v743, 8.507059e+37
  %v745 = vand.u32 %v718, 2147483648
  %v746 = vor.u32 1.1754944e-38, %v745
  %v747 = vsel %vm744, %v746, %v742
  %v748 = vmul.f32 1.0, %v747
  %v749 = vtanh.pop %v710
  %v750 = vmul.f32 %v733, %v656
  %v751 = vmul.f32 %v733, %v749
  %753 = vrot.lane.b32.xlu0 %v751, 64
  %v754 = vpop.permute.xlu0 %753
  %v756 = vadd.f32 %v750, %v754
  %v757 = vtanh.pop %v756
  %v758 = vmul.f32 %v748, %v757
  %760 = vrot.lane.b32.xlu0 %v758, 64
  %v761 = vpop.permute.xlu0 %760
  %763 = vst.msk [vmem:[#allocation3 + $0x28] sm:$0xff] %vm66, %v761
  %764 = vst.msk [vmem:[#allocation3 + $0x10] sm:$0xff] %vm258, %v761
  %v765 = vld [vmem:[#allocation2 + $0x60] sm:$0xff]
  %v766 = vld [vmem:[#allocation2 + $0x68] sm:$0xff]
  %v767 = vsel %vm262, %v761, 0
  %769 = vmatpush.msra.mxu0 0.0
  %770 = vmatpush.msra.mxu0 0.0
  %771 = vmatpush.msra.mxu0 0.0
  %772 = vmatpush.msra.mxu0 0.0
  %773 = vmatpush.msra.mxu0 0.0
  %774 = vmatpush.msra.mxu0 0.0
  %775 = vmatpush.msra.mxu0 0.0
  %776 = vmatpush.msra.mxu0 0.0
  %777 = vmatpush.msra.mxu0 %v203
  %778 = vmatpush.msra.mxu0 %v201
  %779 = vmatpush.msra.mxu0 %v199
  %780 = vmatpush.msra.mxu0 %v197
  %781 = vmatpush.msra.mxu0 %v195
  %782 = vmatpush.msra.mxu0 %v193
  %783 = vmatpush.msra.mxu0 %v191
  %784 = vmatpush.msra.mxu0 %v189
  %785 = vmatmul.f32.gmra.mxu0 %v767
  %v786 = vpop.f32.mrf.mxu0
  %v787 = vadd.f32 0.0, %v786
  %788 = vdwg.mxu0
  %789 = vmatpush.msra.mxu0 0.0
  %790 = vmatpush.msra.mxu0 0.0
  %791 = vmatpush.msra.mxu0 0.0
  %792 = vmatpush.msra.mxu0 0.0
  %793 = vmatpush.msra.mxu0 0.0
  %794 = vmatpush.msra.mxu0 0.0
  %795 = vmatpush.msra.mxu0 0.0
  %796 = vmatpush.msra.mxu0 0.0
  %797 = vmatpush.msra.mxu0 %v204
  %798 = vmatpush.msra.mxu0 %v202
  %799 = vmatpush.msra.mxu0 %v200
  %800 = vmatpush.msra.mxu0 %v198
  %801 = vmatpush.msra.mxu0 %v196
  %802 = vmatpush.msra.mxu0 %v194
  %803 = vmatpush.msra.mxu0 %v192
  %804 = vmatpush.msra.mxu0 %v190
  %805 = vmatmul.f32.gmra.mxu0 %v767
  %v806 = vpop.f32.mrf.mxu0
  %v807 = vadd.f32 0.0, %v806
  %808 = vdwg.mxu0
  %v809 = vadd.f32 %v765, %v787
  %v810 = vadd.f32 %v766, %v807
  %v811 = vxor.u32 %v809, 2147483648
  %v812 = vxor.u32 %v810, 2147483648
  %v813 = vmul.f32 %v811, 1.442695
  %v814 = vpow.pop %v813
  %v815 = vmul.f32 %v812, 1.442695
  %v816 = vpow.pop %v815
  %v817 = vadd.f32 %v814, 1.0
  %v818 = vadd.f32 %v816, 1.0
  %v819 = vrcp.pop %v817
  %v820 = vmul.f32 %v817, %v819
  %v821 = vsub.f32 1.0, %v820
  %v822 = vmul.f32 %v819, %v821
  %v823 = vadd.f32 %v819, %v822
  %vm824 = vweird.f32 %v817
  %vm825 = vweird.f32 %v819
  %vm826 = vmor %vm824, %vm825
  %v827 = vsel %vm826, %v819, %v823
  %v828 = vand.u32 2147483647, %v817
  %vm829 = vcmp.eq.f32.partialorder %v828, 8.507059e+37
  %v830 = vand.u32 %v817, 2147483648
  %v831 = vor.u32 1.1754944e-38, %v830
  %v832 = vsel %vm829, %v831, %v827
  %v833 = vmul.f32 1.0, %v832
  %v834 = vrcp.pop %v818
  %v835 = vmul.f32 %v818, %v834
  %v836 = vsub.f32 1.0, %v835
  %v837 = vmul.f32 %v834, %v836
  %v838 = vadd.f32 %v834, %v837
  %vm839 = vweird.f32 %v818
  %vm840 = vweird.f32 %v834
  %vm841 = vmor %vm839, %vm840
  %v842 = vsel %vm841, %v834, %v838
  %v843 = vand.u32 2147483647, %v818
  %vm844 = vcmp.eq.f32.partialorder %v843, 8.507059e+37
  %v845 = vand.u32 %v818, 2147483648
  %v846 = vor.u32 1.1754944e-38, %v845
  %v847 = vsel %vm844, %v846, %v842
  %v848 = vmul.f32 1.0, %v847
  %v849 = vtanh.pop %v810
  %v850 = vmul.f32 %v833, %v756
  %v851 = vmul.f32 %v833, %v849
  %853 = vrot.lane.b32.xlu0 %v851, 64
  %v854 = vpop.permute.xlu0 %853
  %v856 = vadd.f32 %v850, %v854
  %v857 = vtanh.pop %v856
  %v858 = vmul.f32 %v848, %v857
  %860 = vrot.lane.b32.xlu0 %v858, 64
  %v861 = vpop.permute.xlu0 %860
  %863 = vst.msk [vmem:[#allocation3 + $0x30] sm:$0xff] %vm66, %v861
  %864 = vst.msk [vmem:[#allocation3 + $0x8] sm:$0xff] %vm258, %v861
  %v865 = vld [vmem:[#allocation2 + $0x70] sm:$0xff]
  %v866 = vld [vmem:[#allocation2 + $0x78] sm:$0xff]
  %v867 = vsel %vm262, %v861, 0
  %869 = vmatpush.msra.mxu0 0.0
  %870 = vmatpush.msra.mxu0 0.0
  %871 = vmatpush.msra.mxu0 0.0
  %872 = vmatpush.msra.mxu0 0.0
  %873 = vmatpush.msra.mxu0 0.0
  %874 = vmatpush.msra.mxu0 0.0
  %875 = vmatpush.msra.mxu0 0.0
  %876 = vmatpush.msra.mxu0 0.0
  %877 = vmatpush.msra.mxu0 %v203
  %878 = vmatpush.msra.mxu0 %v201
  %879 = vmatpush.msra.mxu0 %v199
  %880 = vmatpush.msra.mxu0 %v197
  %881 = vmatpush.msra.mxu0 %v195
  %882 = vmatpush.msra.mxu0 %v193
  %883 = vmatpush.msra.mxu0 %v191
  %884 = vmatpush.msra.mxu0 %v189
  %885 = vmatmul.f32.gmra.mxu0 %v867
  %v886 = vpop.f32.mrf.mxu0
  %v887 = vadd.f32 0.0, %v886
  %888 = vdwg.mxu0
  %889 = vmatpush.msra.mxu0 0.0
  %890 = vmatpush.msra.mxu0 0.0
  %891 = vmatpush.msra.mxu0 0.0
  %892 = vmatpush.msra.mxu0 0.0
  %893 = vmatpush.msra.mxu0 0.0
  %894 = vmatpush.msra.mxu0 0.0
  %895 = vmatpush.msra.mxu0 0.0
  %896 = vmatpush.msra.mxu0 0.0
  %897 = vmatpush.msra.mxu0 %v204
  %898 = vmatpush.msra.mxu0 %v202
  %899 = vmatpush.msra.mxu0 %v200
  %900 = vmatpush.msra.mxu0 %v198
  %901 = vmatpush.msra.mxu0 %v196
  %902 = vmatpush.msra.mxu0 %v194
  %903 = vmatpush.msra.mxu0 %v192
  %904 = vmatpush.msra.mxu0 %v190
  %905 = vmatmul.f32.gmra.mxu0 %v867
  %v906 = vpop.f32.mrf.mxu0
  %v907 = vadd.f32 0.0, %v906
  %908 = vdwg.mxu0
  %v909 = vadd.f32 %v865, %v887
  %v910 = vadd.f32 %v866, %v907
  %v911 = vxor.u32 %v909, 2147483648
  %v912 = vxor.u32 %v910, 2147483648
  %v913 = vmul.f32 %v911, 1.442695
  %v914 = vpow.pop %v913
  %v915 = vmul.f32 %v912, 1.442695
  %v916 = vpow.pop %v915
  %v917 = vadd.f32 %v914, 1.0
  %v918 = vadd.f32 %v916, 1.0
  %v919 = vrcp.pop %v917
  %v920 = vmul.f32 %v917, %v919
  %v921 = vsub.f32 1.0, %v920
  %v922 = vmul.f32 %v919, %v921
  %v923 = vadd.f32 %v919, %v922
  %vm924 = vweird.f32 %v917
  %vm925 = vweird.f32 %v919
  %vm926 = vmor %vm924, %vm925
  %v927 = vsel %vm926, %v919, %v923
  %v928 = vand.u32 2147483647, %v917
  %vm929 = vcmp.eq.f32.partialorder %v928, 8.507059e+37
  %v930 = vand.u32 %v917, 2147483648
  %v931 = vor.u32 1.1754944e-38, %v930
  %v932 = vsel %vm929, %v931, %v927
  %v933 = vmul.f32 1.0, %v932
  %v934 = vrcp.pop %v918
  %v935 = vmul.f32 %v918, %v934
  %v936 = vsub.f32 1.0, %v935
  %v937 = vmul.f32 %v934, %v936
  %v938 = vadd.f32 %v934, %v937
  %vm939 = vweird.f32 %v918
  %vm940 = vweird.f32 %v934
  %vm941 = vmor %vm939, %vm940
  %v942 = vsel %vm941, %v934, %v938
  %v943 = vand.u32 2147483647, %v918
  %vm944 = vcmp.eq.f32.partialorder %v943, 8.507059e+37
  %v945 = vand.u32 %v918, 2147483648
  %v946 = vor.u32 1.1754944e-38, %v945
  %v947 = vsel %vm944, %v946, %v942
  %v948 = vmul.f32 1.0, %v947
  %v949 = vtanh.pop %v910
  %v950 = vmul.f32 %v933, %v856
  %v951 = vmul.f32 %v933, %v949
  %953 = vrot.lane.b32.xlu0 %v951, 64
  %v954 = vpop.permute.xlu0 %953
  %v956 = vadd.f32 %v950, %v954
  %v957 = vtanh.pop %v956
  %v958 = vmul.f32 %v948, %v957
  %960 = vrot.lane.b32.xlu0 %v958, 64
  %v961 = vpop.permute.xlu0 %960
  %963 = vst.msk [vmem:[#allocation3 + $0x38] sm:$0xff] %vm66, %v961
  %964 = vst.msk [vmem:[#allocation3] sm:$0xff] %vm258, %v961
  %v965 = vld [vmem:[#allocation3] sm:$0xff]
  %v966 = vld [vmem:[#allocation3 + $0x8] sm:$0xff]
  %v967 = vld [vmem:[#allocation3 + $0x10] sm:$0xff]
  %v968 = vld [vmem:[#allocation3 + $0x18] sm:$0xff]
  %v969 = vld [vmem:[#allocation3 + $0x20] sm:$0xff]
  %v970 = vld [vmem:[#allocation3 + $0x28] sm:$0xff]
  %v971 = vld [vmem:[#allocation3 + $0x30] sm:$0xff]
  %v972 = vld [vmem:[#allocation3 + $0x38] sm:$0xff]
  %v973 = vld [vmem:[%s4] sm:$0xff]
  %v974 = vld [vmem:[%s4 + $0x8] sm:$0xff]
  %v975 = vld [vmem:[%s4 + $0x10] sm:$0xff]
  %v976 = vld [vmem:[%s4 + $0x18] sm:$0xff]
  %v977 = vld [vmem:[%s4 + $0x20] sm:$0xff]
  %v978 = vld [vmem:[%s4 + $0x28] sm:$0xff]
  %v979 = vld [vmem:[%s4 + $0x30] sm:$0xff]
  %v980 = vld [vmem:[%s4 + $0x38] sm:$0xff]
  %v981 = vld [vmem:[%s4 + $0x40] sm:$0xff]
  %v982 = vld [vmem:[%s4 + $0x48] sm:$0xff]
  %v983 = vld [vmem:[%s4 + $0x50] sm:$0xff]
  %v984 = vld [vmem:[%s4 + $0x58] sm:$0xff]
  %v985 = vld [vmem:[%s4 + $0x60] sm:$0xff]
  %v986 = vld [vmem:[%s4 + $0x68] sm:$0xff]
  %v987 = vld [vmem:[%s4 + $0x70] sm:$0xff]
  %v988 = vld [vmem:[%s4 + $0x78] sm:$0xff]
  %v989 = vld [vmem:[%s5] sm:$0x3]
  %v991 = vperm.slane %v989, 0
  %v992 = vperm.slane %v989, 1
  %v996 = vsel %vm262, %v965, 0
  %v999 = vsel %vm262, %v966, 0
  %v1002 = vsel %vm262, %v967, 0
  %v1005 = vsel %vm262, %v968, 0
  %v1008 = vsel %vm262, %v969, 0
  %v1011 = vsel %vm262, %v970, 0
  %v1014 = vsel %vm262, %v971, 0
  %v1017 = vsel %vm262, %v972, 0
  %1019 = vmatpush.msra.mxu0 0.0
  %1020 = vmatpush.msra.mxu0 0.0
  %1021 = vmatpush.msra.mxu0 0.0
  %1022 = vmatpush.msra.mxu0 0.0
  %1023 = vmatpush.msra.mxu0 0.0
  %1024 = vmatpush.msra.mxu0 0.0
  %1025 = vmatpush.msra.mxu0 0.0
  %1026 = vmatpush.msra.mxu0 0.0
  %1027 = vmatpush.msra.mxu0 %v987
  %1028 = vmatpush.msra.mxu0 %v985
  %1029 = vmatpush.msra.mxu0 %v983
  %1030 = vmatpush.msra.mxu0 %v981
  %1031 = vmatpush.msra.mxu0 %v979
  %1032 = vmatpush.msra.mxu0 %v977
  %1033 = vmatpush.msra.mxu0 %v975
  %1034 = vmatpush.msra.mxu0 %v973
  %1035 = vmatmul.f32.gmra.mxu0 %v996
  %v1036 = vpop.f32.mrf.mxu0
  %v1037 = vadd.f32 %v991, %v1036
  %1038 = vmatmul.f32.gmra.mxu0 %v999
  %v1039 = vpop.f32.mrf.mxu0
  %v1040 = vadd.f32 %v991, %v1039
  %1041 = vmatmul.f32.gmra.mxu0 %v1002
  %v1042 = vpop.f32.mrf.mxu0
  %v1043 = vadd.f32 %v991, %v1042
  %1044 = vmatmul.f32.gmra.mxu0 %v1005
  %v1045 = vpop.f32.mrf.mxu0
  %v1046 = vadd.f32 %v991, %v1045
  %1047 = vmatmul.f32.gmra.mxu0 %v1008
  %v1048 = vpop.f32.mrf.mxu0
  %v1049 = vadd.f32 %v991, %v1048
  %1050 = vmatmul.f32.gmra.mxu0 %v1011
  %v1051 = vpop.f32.mrf.mxu0
  %v1052 = vadd.f32 %v991, %v1051
  %1053 = vmatmul.f32.gmra.mxu0 %v1014
  %v1054 = vpop.f32.mrf.mxu0
  %v1055 = vadd.f32 %v991, %v1054
  %1056 = vmatmul.f32.gmra.mxu0 %v1017
  %v1057 = vpop.f32.mrf.mxu0
  %v1058 = vadd.f32 %v991, %v1057
  %1059 = vdwg.mxu0
  %1060 = vmatpush.msra.mxu0 0.0
  %1061 = vmatpush.msra.mxu0 0.0
  %1062 = vmatpush.msra.mxu0 0.0
  %1063 = vmatpush.msra.mxu0 0.0
  %1064 = vmatpush.msra.mxu0 0.0
  %1065 = vmatpush.msra.mxu0 0.0
  %1066 = vmatpush.msra.mxu0 0.0
  %1067 = vmatpush.msra.mxu0 0.0
  %1068 = vmatpush.msra.mxu0 %v988
  %1069 = vmatpush.msra.mxu0 %v986
  %1070 = vmatpush.msra.mxu0 %v984
  %1071 = vmatpush.msra.mxu0 %v982
  %1072 = vmatpush.msra.mxu0 %v980
  %1073 = vmatpush.msra.mxu0 %v978
  %1074 = vmatpush.msra.mxu0 %v976
  %1075 = vmatpush.msra.mxu0 %v974
  %1076 = vmatmul.f32.gmra.mxu0 %v996
  %v1077 = vpop.f32.mrf.mxu0
  %v1078 = vadd.f32 %v992, %v1077
  %1079 = vmatmul.f32.gmra.mxu0 %v999
  %v1080 = vpop.f32.mrf.mxu0
  %v1081 = vadd.f32 %v992, %v1080
  %1082 = vmatmul.f32.gmra.mxu0 %v1002
  %v1083 = vpop.f32.mrf.mxu0
  %v1084 = vadd.f32 %v992, %v1083
  %1085 = vmatmul.f32.gmra.mxu0 %v1005
  %v1086 = vpop.f32.mrf.mxu0
  %v1087 = vadd.f32 %v992, %v1086
  %1088 = vmatmul.f32.gmra.mxu0 %v1008
  %v1089 = vpop.f32.mrf.mxu0
  %v1090 = vadd.f32 %v992, %v1089
  %1091 = vmatmul.f32.gmra.mxu0 %v1011
  %v1092 = vpop.f32.mrf.mxu0
  %v1093 = vadd.f32 %v992, %v1092
  %1094 = vmatmul.f32.gmra.mxu0 %v1014
  %v1095 = vpop.f32.mrf.mxu0
  %v1096 = vadd.f32 %v992, %v1095
  %1097 = vmatmul.f32.gmra.mxu0 %v1017
  %v1098 = vpop.f32.mrf.mxu0
  %v1099 = vadd.f32 %v992, %v1098
  %1100 = vdwg.mxu0
  %1101 = vst [vmem:[#allocation2] sm:$0xff] %v1037
  %1102 = vst [vmem:[#allocation2 + $0x8] sm:$0xff] %v1078
  %1103 = vst [vmem:[#allocation2 + $0x10] sm:$0xff] %v1040
  %1104 = vst [vmem:[#allocation2 + $0x18] sm:$0xff] %v1081
  %1105 = vst [vmem:[#allocation2 + $0x20] sm:$0xff] %v1043
  %1106 = vst [vmem:[#allocation2 + $0x28] sm:$0xff] %v1084
  %1107 = vst [vmem:[#allocation2 + $0x30] sm:$0xff] %v1046
  %1108 = vst [vmem:[#allocation2 + $0x38] sm:$0xff] %v1087
  %1109 = vst [vmem:[#allocation2 + $0x40] sm:$0xff] %v1049
  %1110 = vst [vmem:[#allocation2 + $0x48] sm:$0xff] %v1090
  %1111 = vst [vmem:[#allocation2 + $0x50] sm:$0xff] %v1052
  %1112 = vst [vmem:[#allocation2 + $0x58] sm:$0xff] %v1093
  %1113 = vst [vmem:[#allocation2 + $0x60] sm:$0xff] %v1055
  %1114 = vst [vmem:[#allocation2 + $0x68] sm:$0xff] %v1096
  %1115 = vst [vmem:[#allocation2 + $0x70] sm:$0xff] %v1058
  %1116 = vst [vmem:[#allocation2 + $0x78] sm:$0xff] %v1099
  %v1117 = vld [vmem:[%s6] sm:$0xff]
  %v1118 = vld [vmem:[%s6 + $0x8] sm:$0xff]
  %v1119 = vld [vmem:[%s6 + $0x10] sm:$0xff]
  %v1120 = vld [vmem:[%s6 + $0x18] sm:$0xff]
  %v1121 = vld [vmem:[#allocation2] sm:$0xff]
  %v1122 = vxor.u32 %v1121, 2147483648
  %v1123 = vmul.f32 %v1122, 1.442695
  %v1124 = vpow.pop %v1123
  %v1125 = vadd.f32 %v1124, 1.0
  %v1126 = vrcp.pop %v1125
  %v1127 = vmul.f32 %v1125, %v1126
  %v1128 = vsub.f32 1.0, %v1127
  %v1129 = vmul.f32 %v1126, %v1128
  %v1130 = vadd.f32 %v1126, %v1129
  %vm1131 = vweird.f32 %v1125
  %vm1132 = vweird.f32 %v1126
  %vm1133 = vmor %vm1131, %vm1132
  %v1134 = vsel %vm1133, %v1126, %v1130
  %v1135 = vand.u32 2147483647, %v1125
  %vm1136 = vcmp.eq.f32.partialorder %v1135, 8.507059e+37
  %v1137 = vand.u32 %v1125, 2147483648
  %v1138 = vor.u32 1.1754944e-38, %v1137
  %v1139 = vsel %vm1136, %v1138, %v1134
  %v1140 = vmul.f32 1.0, %v1139
  %v1141 = vtanh.pop %v1121
  %1143 = vrot.lane.b32.xlu0 %v1141, 64
  %v1144 = vpop.permute.xlu0 %1143
  %v1146 = vmul.f32 %v1140, %v1144
  %v1147 = vtanh.pop %v1146
  %1149 = vrot.lane.b32.xlu0 %v1147, 96
  %v1150 = vpop.permute.xlu0 %1149
  %v1152 = vmul.f32 %v1140, %v1150
  %v1153 = vld [vmem:[#allocation2 + $0x10] sm:$0xff]
  %1155 = vrot.lane.b32.xlu0 %v1152, 32
  %v1156 = vpop.permute.xlu0 %1155
  %v1157 = vsel %vm66, %v1156, 0
  %1159 = vmatpush.msra.mxu0 0.0
  %1160 = vmatpush.msra.mxu0 0.0
  %1161 = vmatpush.msra.mxu0 0.0
  %1162 = vmatpush.msra.mxu0 0.0
  %1163 = vmatpush.msra.mxu0 0.0
  %1164 = vmatpush.msra.mxu0 0.0
  %1165 = vmatpush.msra.mxu0 0.0
  %1166 = vmatpush.msra.mxu0 0.0
  %1167 = vmatpush.msra.mxu0 0.0
  %1168 = vmatpush.msra.mxu0 0.0
  %1169 = vmatpush.msra.mxu0 0.0
  %1170 = vmatpush.msra.mxu0 0.0
  %1171 = vmatpush.msra.mxu0 %v1120
  %1172 = vmatpush.msra.mxu0 %v1119
  %1173 = vmatpush.msra.mxu0 %v1118
  %1174 = vmatpush.msra.mxu0 %v1117
  %1175 = vmatmul.f32.gmra.mxu0 %v1157
  %v1176 = vpop.f32.mrf.mxu0
  %v1177 = vadd.f32 0.0, %v1176
  %1178 = vdwg.mxu0
  %v1179 = vadd.f32 %v1153, %v1177
  %v1180 = vxor.u32 %v1179, 2147483648
  %v1181 = vmul.f32 %v1180, 1.442695
  %v1182 = vpow.pop %v1181
  %v1183 = vadd.f32 %v1182, 1.0
  %v1184 = vrcp.pop %v1183
  %v1185 = vmul.f32 %v1183, %v1184
  %v1186 = vsub.f32 1.0, %v1185
  %v1187 = vmul.f32 %v1184, %v1186
  %v1188 = vadd.f32 %v1184, %v1187
  %vm1189 = vweird.f32 %v1183
  %vm1190 = vweird.f32 %v1184
  %vm1191 = vmor %vm1189, %vm1190
  %v1192 = vsel %vm1191, %v1184, %v1188
  %v1193 = vand.u32 2147483647, %v1183
  %vm1194 = vcmp.eq.f32.partialorder %v1193, 8.507059e+37
  %v1195 = vand.u32 %v1183, 2147483648
  %v1196 = vor.u32 1.1754944e-38, %v1195
  %v1197 = vsel %vm1194, %v1196, %v1192
  %v1198 = vmul.f32 1.0, %v1197
  %v1199 = vtanh.pop %v1179
  %1201 = vrot.lane.b32.xlu0 %v1146, 32
  %v1202 = vpop.permute.xlu0 %1201
  %v1204 = vmul.f32 %v1198, %v1202
  %1206 = vrot.lane.b32.xlu0 %v1199, 64
  %v1207 = vpop.permute.xlu0 %1206
  %v1209 = vmul.f32 %v1198, %v1207
  %1211 = vrot.lane.b32.xlu0 %v1209, 32
  %v1212 = vpop.permute.xlu0 %1211
  %v1214 = vadd.f32 %v1204, %v1212
  %v1215 = vtanh.pop %v1214
  %1217 = vrot.lane.b32.xlu0 %v1215, 64
  %v1218 = vpop.permute.xlu0 %1217
  %v1220 = vmul.f32 %v1198, %v1218
  %v1221 = vld [vmem:[#allocation2 + $0x20] sm:$0xff]
  %1223 = vrot.lane.b32.xlu0 %v1220, 32
  %v1224 = vpop.permute.xlu0 %1223
  %v1225 = vsel %vm66, %v1224, 0
  %1227 = vmatpush.msra.mxu0 0.0
  %1228 = vmatpush.msra.mxu0 0.0
  %1229 = vmatpush.msra.mxu0 0.0
  %1230 = vmatpush.msra.mxu0 0.0
  %1231 = vmatpush.msra.mxu0 0.0
  %1232 = vmatpush.msra.mxu0 0.0
  %1233 = vmatpush.msra.mxu0 0.0
  %1234 = vmatpush.msra.mxu0 0.0
  %1235 = vmatpush.msra.mxu0 0.0
  %1236 = vmatpush.msra.mxu0 0.0
  %1237 = vmatpush.msra.mxu0 0.0
  %1238 = vmatpush.msra.mxu0 0.0
  %1239 = vmatpush.msra.mxu0 %v1120
  %1240 = vmatpush.msra.mxu0 %v1119
  %1241 = vmatpush.msra.mxu0 %v1118
  %1242 = vmatpush.msra.mxu0 %v1117
  %1243 = vmatmul.f32.gmra.mxu0 %v1225
  %v1244 = vpop.f32.mrf.mxu0
  %v1245 = vadd.f32 0.0, %v1244
  %1246 = vdwg.mxu0
  %v1247 = vadd.f32 %v1221, %v1245
  %v1248 = vxor.u32 %v1247, 2147483648
  %v1249 = vmul.f32 %v1248, 1.442695
  %v1250 = vpow.pop %v1249
  %v1251 = vadd.f32 %v1250, 1.0
  %v1252 = vrcp.pop %v1251
  %v1253 = vmul.f32 %v1251, %v1252
  %v1254 = vsub.f32 1.0, %v1253
  %v1255 = vmul.f32 %v1252, %v1254
  %v1256 = vadd.f32 %v1252, %v1255
  %vm1257 = vweird.f32 %v1251
  %vm1258 = vweird.f32 %v1252
  %vm1259 = vmor %vm1257, %vm1258
  %v1260 = vsel %vm1259, %v1252, %v1256
  %v1261 = vand.u32 2147483647, %v1251
  %vm1262 = vcmp.eq.f32.partialorder %v1261, 8.507059e+37
  %v1263 = vand.u32 %v1251, 2147483648
  %v1264 = vor.u32 1.1754944e-38, %v1263
  %v1265 = vsel %vm1262, %v1264, %v1260
  %v1266 = vmul.f32 1.0, %v1265
  %v1267 = vtanh.pop %v1247
  %v1268 = vmul.f32 %v1266, %v1214
  %1270 = vrot.lane.b32.xlu0 %v1267, 64
  %v1271 = vpop.permute.xlu0 %1270
  %v1273 = vmul.f32 %v1266, %v1271
  %1275 = vrot.lane.b32.xlu0 %v1273, 32
  %v1276 = vpop.permute.xlu0 %1275
  %v1278 = vadd.f32 %v1268, %v1276
  %v1279 = vtanh.pop %v1278
  %1281 = vrot.lane.b32.xlu0 %v1279, 64
  %v1282 = vpop.permute.xlu0 %1281
  %v1284 = vmul.f32 %v1266, %v1282
  %v1285 = vld [vmem:[#allocation2 + $0x30] sm:$0xff]
  %1287 = vrot.lane.b32.xlu0 %v1284, 32
  %v1288 = vpop.permute.xlu0 %1287
  %v1289 = vsel %vm66, %v1288, 0
  %1291 = vmatpush.msra.mxu0 0.0
  %1292 = vmatpush.msra.mxu0 0.0
  %1293 = vmatpush.msra.mxu0 0.0
  %1294 = vmatpush.msra.mxu0 0.0
  %1295 = vmatpush.msra.mxu0 0.0
  %1296 = vmatpush.msra.mxu0 0.0
  %1297 = vmatpush.msra.mxu0 0.0
  %1298 = vmatpush.msra.mxu0 0.0
  %1299 = vmatpush.msra.mxu0 0.0
  %1300 = vmatpush.msra.mxu0 0.0
  %1301 = vmatpush.msra.mxu0 0.0
  %1302 = vmatpush.msra.mxu0 0.0
  %1303 = vmatpush.msra.mxu0 %v1120
  %1304 = vmatpush.msra.mxu0 %v1119
  %1305 = vmatpush.msra.mxu0 %v1118
  %1306 = vmatpush.msra.mxu0 %v1117
  %1307 = vmatmul.f32.gmra.mxu0 %v1289
  %v1308 = vpop.f32.mrf.mxu0
  %v1309 = vadd.f32 0.0, %v1308
  %1310 = vdwg.mxu0
  %v1311 = vadd.f32 %v1285, %v1309
  %v1312 = vxor.u32 %v1311, 2147483648
  %v1313 = vmul.f32 %v1312, 1.442695
  %v1314 = vpow.pop %v1313
  %v1315 = vadd.f32 %v1314, 1.0
  %v1316 = vrcp.pop %v1315
  %v1317 = vmul.f32 %v1315, %v1316
  %v1318 = vsub.f32 1.0, %v1317
  %v1319 = vmul.f32 %v1316, %v1318
  %v1320 = vadd.f32 %v1316, %v1319
  %vm1321 = vweird.f32 %v1315
  %vm1322 = vweird.f32 %v1316
  %vm1323 = vmor %vm1321, %vm1322
  %v1324 = vsel %vm1323, %v1316, %v1320
  %v1325 = vand.u32 2147483647, %v1315
  %vm1326 = vcmp.eq.f32.partialorder %v1325, 8.507059e+37
  %v1327 = vand.u32 %v1315, 2147483648
  %v1328 = vor.u32 1.1754944e-38, %v1327
  %v1329 = vsel %vm1326, %v1328, %v1324
  %v1330 = vmul.f32 1.0, %v1329
  %v1331 = vtanh.pop %v1311
  %v1332 = vmul.f32 %v1330, %v1278
  %1334 = vrot.lane.b32.xlu0 %v1331, 64
  %v1335 = vpop.permute.xlu0 %1334
  %v1337 = vmul.f32 %v1330, %v1335
  %1339 = vrot.lane.b32.xlu0 %v1337, 32
  %v1340 = vpop.permute.xlu0 %1339
  %v1342 = vadd.f32 %v1332, %v1340
  %v1343 = vtanh.pop %v1342
  %1345 = vrot.lane.b32.xlu0 %v1343, 64
  %v1346 = vpop.permute.xlu0 %1345
  %v1348 = vmul.f32 %v1330, %v1346
  %v1349 = vld [vmem:[#allocation2 + $0x40] sm:$0xff]
  %1351 = vrot.lane.b32.xlu0 %v1348, 32
  %v1352 = vpop.permute.xlu0 %1351
  %v1353 = vsel %vm66, %v1352, 0
  %1355 = vmatpush.msra.mxu0 0.0
  %1356 = vmatpush.msra.mxu0 0.0
  %1357 = vmatpush.msra.mxu0 0.0
  %1358 = vmatpush.msra.mxu0 0.0
  %1359 = vmatpush.msra.mxu0 0.0
  %1360 = vmatpush.msra.mxu0 0.0
  %1361 = vmatpush.msra.mxu0 0.0
  %1362 = vmatpush.msra.mxu0 0.0
  %1363 = vmatpush.msra.mxu0 0.0
  %1364 = vmatpush.msra.mxu0 0.0
  %1365 = vmatpush.msra.mxu0 0.0
  %1366 = vmatpush.msra.mxu0 0.0
  %1367 = vmatpush.msra.mxu0 %v1120
  %1368 = vmatpush.msra.mxu0 %v1119
  %1369 = vmatpush.msra.mxu0 %v1118
  %1370 = vmatpush.msra.mxu0 %v1117
  %1371 = vmatmul.f32.gmra.mxu0 %v1353
  %v1372 = vpop.f32.mrf.mxu0
  %v1373 = vadd.f32 0.0, %v1372
  %1374 = vdwg.mxu0
  %v1375 = vadd.f32 %v1349, %v1373
  %v1376 = vxor.u32 %v1375, 2147483648
  %v1377 = vmul.f32 %v1376, 1.442695
  %v1378 = vpow.pop %v1377
  %v1379 = vadd.f32 %v1378, 1.0
  %v1380 = vrcp.pop %v1379
  %v1381 = vmul.f32 %v1379, %v1380
  %v1382 = vsub.f32 1.0, %v1381
  %v1383 = vmul.f32 %v1380, %v1382
  %v1384 = vadd.f32 %v1380, %v1383
  %vm1385 = vweird.f32 %v1379
  %vm1386 = vweird.f32 %v1380
  %vm1387 = vmor %vm1385, %vm1386
  %v1388 = vsel %vm1387, %v1380, %v1384
  %v1389 = vand.u32 2147483647, %v1379
  %vm1390 = vcmp.eq.f32.partialorder %v1389, 8.507059e+37
  %v1391 = vand.u32 %v1379, 2147483648
  %v1392 = vor.u32 1.1754944e-38, %v1391
  %v1393 = vsel %vm1390, %v1392, %v1388
  %v1394 = vmul.f32 1.0, %v1393
  %v1395 = vtanh.pop %v1375
  %v1396 = vmul.f32 %v1394, %v1342
  %1398 = vrot.lane.b32.xlu0 %v1395, 64
  %v1399 = vpop.permute.xlu0 %1398
  %v1401 = vmul.f32 %v1394, %v1399
  %1403 = vrot.lane.b32.xlu0 %v1401, 32
  %v1404 = vpop.permute.xlu0 %1403
  %v1406 = vadd.f32 %v1396, %v1404
  %v1407 = vtanh.pop %v1406
  %1409 = vrot.lane.b32.xlu0 %v1407, 64
  %v1410 = vpop.permute.xlu0 %1409
  %v1412 = vmul.f32 %v1394, %v1410
  %v1413 = vld [vmem:[#allocation2 + $0x50] sm:$0xff]
  %1415 = vrot.lane.b32.xlu0 %v1412, 32
  %v1416 = vpop.permute.xlu0 %1415
  %v1417 = vsel %vm66, %v1416, 0
  %1419 = vmatpush.msra.mxu0 0.0
  %1420 = vmatpush.msra.mxu0 0.0
  %1421 = vmatpush.msra.mxu0 0.0
  %1422 = vmatpush.msra.mxu0 0.0
  %1423 = vmatpush.msra.mxu0 0.0
  %1424 = vmatpush.msra.mxu0 0.0
  %1425 = vmatpush.msra.mxu0 0.0
  %1426 = vmatpush.msra.mxu0 0.0
  %1427 = vmatpush.msra.mxu0 0.0
  %1428 = vmatpush.msra.mxu0 0.0
  %1429 = vmatpush.msra.mxu0 0.0
  %1430 = vmatpush.msra.mxu0 0.0
  %1431 = vmatpush.msra.mxu0 %v1120
  %1432 = vmatpush.msra.mxu0 %v1119
  %1433 = vmatpush.msra.mxu0 %v1118
  %1434 = vmatpush.msra.mxu0 %v1117
  %1435 = vmatmul.f32.gmra.mxu0 %v1417
  %v1436 = vpop.f32.mrf.mxu0
  %v1437 = vadd.f32 0.0, %v1436
  %1438 = vdwg.mxu0
  %v1439 = vadd.f32 %v1413, %v1437
  %v1440 = vxor.u32 %v1439, 2147483648
  %v1441 = vmul.f32 %v1440, 1.442695
  %v1442 = vpow.pop %v1441
  %v1443 = vadd.f32 %v1442, 1.0
  %v1444 = vrcp.pop %v1443
  %v1445 = vmul.f32 %v1443, %v1444
  %v1446 = vsub.f32 1.0, %v1445
  %v1447 = vmul.f32 %v1444, %v1446
  %v1448 = vadd.f32 %v1444, %v1447
  %vm1449 = vweird.f32 %v1443
  %vm1450 = vweird.f32 %v1444
  %vm1451 = vmor %vm1449, %vm1450
  %v1452 = vsel %vm1451, %v1444, %v1448
  %v1453 = vand.u32 2147483647, %v1443
  %vm1454 = vcmp.eq.f32.partialorder %v1453, 8.507059e+37
  %v1455 = vand.u32 %v1443, 2147483648
  %v1456 = vor.u32 1.1754944e-38, %v1455
  %v1457 = vsel %vm1454, %v1456, %v1452
  %v1458 = vmul.f32 1.0, %v1457
  %v1459 = vtanh.pop %v1439
  %v1460 = vmul.f32 %v1458, %v1406
  %1462 = vrot.lane.b32.xlu0 %v1459, 64
  %v1463 = vpop.permute.xlu0 %1462
  %v1465 = vmul.f32 %v1458, %v1463
  %1467 = vrot.lane.b32.xlu0 %v1465, 32
  %v1468 = vpop.permute.xlu0 %1467
  %v1470 = vadd.f32 %v1460, %v1468
  %v1471 = vtanh.pop %v1470
  %1473 = vrot.lane.b32.xlu0 %v1471, 64
  %v1474 = vpop.permute.xlu0 %1473
  %v1476 = vmul.f32 %v1458, %v1474
  %v1477 = vld [vmem:[#allocation2 + $0x60] sm:$0xff]
  %1479 = vrot.lane.b32.xlu0 %v1476, 32
  %v1480 = vpop.permute.xlu0 %1479
  %v1481 = vsel %vm66, %v1480, 0
  %1483 = vmatpush.msra.mxu0 0.0
  %1484 = vmatpush.msra.mxu0 0.0
  %1485 = vmatpush.msra.mxu0 0.0
  %1486 = vmatpush.msra.mxu0 0.0
  %1487 = vmatpush.msra.mxu0 0.0
  %1488 = vmatpush.msra.mxu0 0.0
  %1489 = vmatpush.msra.mxu0 0.0
  %1490 = vmatpush.msra.mxu0 0.0
  %1491 = vmatpush.msra.mxu0 0.0
  %1492 = vmatpush.msra.mxu0 0.0
  %1493 = vmatpush.msra.mxu0 0.0
  %1494 = vmatpush.msra.mxu0 0.0
  %1495 = vmatpush.msra.mxu0 %v1120
  %1496 = vmatpush.msra.mxu0 %v1119
  %1497 = vmatpush.msra.mxu0 %v1118
  %1498 = vmatpush.msra.mxu0 %v1117
  %1499 = vmatmul.f32.gmra.mxu0 %v1481
  %v1500 = vpop.f32.mrf.mxu0
  %v1501 = vadd.f32 0.0, %v1500
  %1502 = vdwg.mxu0
  %v1503 = vadd.f32 %v1477, %v1501
  %v1504 = vxor.u32 %v1503, 2147483648
  %v1505 = vmul.f32 %v1504, 1.442695
  %v1506 = vpow.pop %v1505
  %v1507 = vadd.f32 %v1506, 1.0
  %v1508 = vrcp.pop %v1507
  %v1509 = vmul.f32 %v1507, %v1508
  %v1510 = vsub.f32 1.0, %v1509
  %v1511 = vmul.f32 %v1508, %v1510
  %v1512 = vadd.f32 %v1508, %v1511
  %vm1513 = vweird.f32 %v1507
  %vm1514 = vweird.f32 %v1508
  %vm1515 = vmor %vm1513, %vm1514
  %v1516 = vsel %vm1515, %v1508, %v1512
  %v1517 = vand.u32 2147483647, %v1507
  %vm1518 = vcmp.eq.f32.partialorder %v1517, 8.507059e+37
  %v1519 = vand.u32 %v1507, 2147483648
  %v1520 = vor.u32 1.1754944e-38, %v1519
  %v1521 = vsel %vm1518, %v1520, %v1516
  %v1522 = vmul.f32 1.0, %v1521
  %v1523 = vtanh.pop %v1503
  %v1524 = vmul.f32 %v1522, %v1470
  %1526 = vrot.lane.b32.xlu0 %v1523, 64
  %v1527 = vpop.permute.xlu0 %1526
  %v1529 = vmul.f32 %v1522, %v1527
  %1531 = vrot.lane.b32.xlu0 %v1529, 32
  %v1532 = vpop.permute.xlu0 %1531
  %v1534 = vadd.f32 %v1524, %v1532
  %v1535 = vtanh.pop %v1534
  %1537 = vrot.lane.b32.xlu0 %v1535, 64
  %v1538 = vpop.permute.xlu0 %1537
  %v1540 = vmul.f32 %v1522, %v1538
  %v1541 = vld [vmem:[#allocation2 + $0x70] sm:$0xff]
  %1543 = vrot.lane.b32.xlu0 %v1540, 32
  %v1544 = vpop.permute.xlu0 %1543
  %v1545 = vsel %vm66, %v1544, 0
  %1547 = vmatpush.msra.mxu0 0.0
  %1548 = vmatpush.msra.mxu0 0.0
  %1549 = vmatpush.msra.mxu0 0.0
  %1550 = vmatpush.msra.mxu0 0.0
  %1551 = vmatpush.msra.mxu0 0.0
  %1552 = vmatpush.msra.mxu0 0.0
  %1553 = vmatpush.msra.mxu0 0.0
  %1554 = vmatpush.msra.mxu0 0.0
  %1555 = vmatpush.msra.mxu0 0.0
  %1556 = vmatpush.msra.mxu0 0.0
  %1557 = vmatpush.msra.mxu0 0.0
  %1558 = vmatpush.msra.mxu0 0.0
  %1559 = vmatpush.msra.mxu0 %v1120
  %1560 = vmatpush.msra.mxu0 %v1119
  %1561 = vmatpush.msra.mxu0 %v1118
  %1562 = vmatpush.msra.mxu0 %v1117
  %1563 = vmatmul.f32.gmra.mxu0 %v1545
  %v1564 = vpop.f32.mrf.mxu0
  %v1565 = vadd.f32 0.0, %v1564
  %1566 = vdwg.mxu0
  %v1567 = vadd.f32 %v1541, %v1565
  %v1568 = vxor.u32 %v1567, 2147483648
  %v1569 = vmul.f32 %v1568, 1.442695
  %v1570 = vpow.pop %v1569
  %v1571 = vadd.f32 %v1570, 1.0
  %v1572 = vrcp.pop %v1571
  %v1573 = vmul.f32 %v1571, %v1572
  %v1574 = vsub.f32 1.0, %v1573
  %v1575 = vmul.f32 %v1572, %v1574
  %v1576 = vadd.f32 %v1572, %v1575
  %vm1577 = vweird.f32 %v1571
  %vm1578 = vweird.f32 %v1572
  %vm1579 = vmor %vm1577, %vm1578
  %v1580 = vsel %vm1579, %v1572, %v1576
  %v1581 = vand.u32 2147483647, %v1571
  %vm1582 = vcmp.eq.f32.partialorder %v1581, 8.507059e+37
  %v1583 = vand.u32 %v1571, 2147483648
  %v1584 = vor.u32 1.1754944e-38, %v1583
  %v1585 = vsel %vm1582, %v1584, %v1580
  %v1586 = vmul.f32 1.0, %v1585
  %v1587 = vtanh.pop %v1567
  %v1588 = vmul.f32 %v1586, %v1534
  %1590 = vrot.lane.b32.xlu0 %v1587, 64
  %v1591 = vpop.permute.xlu0 %1590
  %v1593 = vmul.f32 %v1586, %v1591
  %1595 = vrot.lane.b32.xlu0 %v1593, 32
  %v1596 = vpop.permute.xlu0 %1595
  %v1598 = vadd.f32 %v1588, %v1596
  %v1599 = vtanh.pop %v1598
  %1601 = vrot.lane.b32.xlu0 %v1599, 64
  %v1602 = vpop.permute.xlu0 %1601
  %v1604 = vmul.f32 %v1586, %v1602
  %v1605 = vld [vmem:[#allocation2 + $0x78] sm:$0xff]
  %v1606 = vxor.u32 %v1605, 2147483648
  %v1607 = vmul.f32 %v1606, 1.442695
  %v1608 = vpow.pop %v1607
  %v1609 = vadd.f32 %v1608, 1.0
  %v1610 = vrcp.pop %v1609
  %v1611 = vmul.f32 %v1609, %v1610
  %v1612 = vsub.f32 1.0, %v1611
  %v1613 = vmul.f32 %v1610, %v1612
  %v1614 = vadd.f32 %v1610, %v1613
  %vm1615 = vweird.f32 %v1609
  %vm1616 = vweird.f32 %v1610
  %vm1617 = vmor %vm1615, %vm1616
  %v1618 = vsel %vm1617, %v1610, %v1614
  %v1619 = vand.u32 2147483647, %v1609
  %vm1620 = vcmp.eq.f32.partialorder %v1619, 8.507059e+37
  %v1621 = vand.u32 %v1609, 2147483648
  %v1622 = vor.u32 1.1754944e-38, %v1621
  %v1623 = vsel %vm1620, %v1622, %v1618
  %v1624 = vmul.f32 1.0, %v1623
  %v1625 = vtanh.pop %v1605
  %1627 = vrot.lane.b32.xlu0 %v1625, 64
  %v1628 = vpop.permute.xlu0 %1627
  %v1630 = vmul.f32 %v1624, %v1628
  %v1631 = vtanh.pop %v1630
  %1633 = vrot.lane.b32.xlu0 %v1631, 96
  %v1634 = vpop.permute.xlu0 %1633
  %v1636 = vmul.f32 %v1624, %v1634
  %v1637 = vld [vmem:[%s7] sm:$0xff]
  %v1638 = vld [vmem:[%s7 + $0x8] sm:$0xff]
  %v1639 = vld [vmem:[%s7 + $0x10] sm:$0xff]
  %v1640 = vld [vmem:[%s7 + $0x18] sm:$0xff]
  %v1641 = vld [vmem:[%s7 + $0x20] sm:$0xff]
  %v1642 = vld [vmem:[%s7 + $0x28] sm:$0xff]
  %v1643 = vld [vmem:[%s7 + $0x30] sm:$0xff]
  %v1644 = vld [vmem:[%s7 + $0x38] sm:$0xff]
  %1646 = vrot.lane.b32.xlu0 %v1636, 32
  %v1647 = vpop.permute.xlu0 %1646
  %v1648 = vsel %vm66, %v1647, 0
  %1650 = vmatpush.msra.mxu0 0.0
  %1651 = vmatpush.msra.mxu0 0.0
  %1652 = vmatpush.msra.mxu0 0.0
  %1653 = vmatpush.msra.mxu0 0.0
  %1654 = vmatpush.msra.mxu0 0.0
  %1655 = vmatpush.msra.mxu0 0.0
  %1656 = vmatpush.msra.mxu0 0.0
  %1657 = vmatpush.msra.mxu0 0.0
  %1658 = vmatpush.msra.mxu0 0.0
  %1659 = vmatpush.msra.mxu0 0.0
  %1660 = vmatpush.msra.mxu0 0.0
  %1661 = vmatpush.msra.mxu0 0.0
  %1662 = vmatpush.msra.mxu0 %v1644
  %1663 = vmatpush.msra.mxu0 %v1643
  %1664 = vmatpush.msra.mxu0 %v1642
  %1665 = vmatpush.msra.mxu0 %v1641
  %1666 = vmatmul.f32.gmra.mxu0 %v1648
  %v1667 = vpop.f32.mrf.mxu0
  %v1668 = vadd.f32 0.0, %v1667
  %1669 = vdwg.mxu0
  %1671 = vrot.lane.b32.xlu0 %v1604, 32
  %v1672 = vpop.permute.xlu0 %1671
  %v1673 = vsel %vm66, %v1672, 0
  %1675 = vmatpush.msra.mxu0 0.0
  %1676 = vmatpush.msra.mxu0 0.0
  %1677 = vmatpush.msra.mxu0 0.0
  %1678 = vmatpush.msra.mxu0 0.0
  %1679 = vmatpush.msra.mxu0 0.0
  %1680 = vmatpush.msra.mxu0 0.0
  %1681 = vmatpush.msra.mxu0 0.0
  %1682 = vmatpush.msra.mxu0 0.0
  %1683 = vmatpush.msra.mxu0 0.0
  %1684 = vmatpush.msra.mxu0 0.0
  %1685 = vmatpush.msra.mxu0 0.0
  %1686 = vmatpush.msra.mxu0 0.0
  %1687 = vmatpush.msra.mxu0 %v1640
  %1688 = vmatpush.msra.mxu0 %v1639
  %1689 = vmatpush.msra.mxu0 %v1638
  %1690 = vmatpush.msra.mxu0 %v1637
  %1691 = vmatmul.f32.gmra.mxu0 %v1673
  %v1692 = vpop.f32.mrf.mxu0
  %v1693 = vadd.f32 %v1668, %v1692
  %1694 = vdwg.mxu0
  %v1695 = vld [vmem:[%s8] sm:$0x1]
  %v1697 = vperm.slane %v1695, 0
  %v1699 = vadd.f32 %v1693, %v1697
  %v1700 = vmax.f32 %v1699, 0.0
  %v1701 = vld [vmem:[%s9] sm:$0xff]
  %v1702 = vld [vmem:[%s9 + $0x8] sm:$0xff]
  %v1703 = vld [vmem:[%s9 + $0x10] sm:$0xff]
  %v1704 = vld [vmem:[%s9 + $0x18] sm:$0xff]
  %v1705 = vld [vmem:[%s9 + $0x20] sm:$0xff]
  %v1706 = vld [vmem:[%s9 + $0x28] sm:$0xff]
  %v1707 = vld [vmem:[%s9 + $0x30] sm:$0xff]
  %v1708 = vld [vmem:[%s9 + $0x38] sm:$0xff]
  %v1709 = vld [vmem:[%s10] sm:$0x1]
  %v1711 = vperm.slane %v1709, 0
  %v1714 = vsel %vm262, %v1700, 0
  %1716 = vmatpush.msra.mxu0 0.0
  %1717 = vmatpush.msra.mxu0 0.0
  %1718 = vmatpush.msra.mxu0 0.0
  %1719 = vmatpush.msra.mxu0 0.0
  %1720 = vmatpush.msra.mxu0 0.0
  %1721 = vmatpush.msra.mxu0 0.0
  %1722 = vmatpush.msra.mxu0 0.0
  %1723 = vmatpush.msra.mxu0 0.0
  %1724 = vmatpush.msra.mxu0 %v1708
  %1725 = vmatpush.msra.mxu0 %v1707
  %1726 = vmatpush.msra.mxu0 %v1706
  %1727 = vmatpush.msra.mxu0 %v1705
  %1728 = vmatpush.msra.mxu0 %v1704
  %1729 = vmatpush.msra.mxu0 %v1703
  %1730 = vmatpush.msra.mxu0 %v1702
  %1731 = vmatpush.msra.mxu0 %v1701
  %1732 = vmatmul.f32.gmra.mxu0 %v1714
  %v1733 = vpop.f32.mrf.mxu0
  %v1734 = vadd.f32 %v1711, %v1733
  %1735 = vdwg.mxu0
  %v1736 = vmax.f32 %v1734, 0.0
  %v1737 = vld [vmem:[%s11] sm:$0xff]
  %v1738 = vld [vmem:[%s11 + $0x8] sm:$0xff]
  %v1739 = vld [vmem:[%s11 + $0x10] sm:$0xff]
  %v1740 = vld [vmem:[%s11 + $0x18] sm:$0xff]
  %v1741 = vld [vmem:[%s12] sm:$0x1]
  %v1743 = vperm.slane %v1741, 0
  %v1746 = vsel %vm66, %v1736, 0
  %1748 = vmatpush.msra.mxu0 0.0
  %1749 = vmatpush.msra.mxu0 0.0
  %1750 = vmatpush.msra.mxu0 0.0
  %1751 = vmatpush.msra.mxu0 0.0
  %1752 = vmatpush.msra.mxu0 0.0
  %1753 = vmatpush.msra.mxu0 0.0
  %1754 = vmatpush.msra.mxu0 0.0
  %1755 = vmatpush.msra.mxu0 0.0
  %1756 = vmatpush.msra.mxu0 0.0
  %1757 = vmatpush.msra.mxu0 0.0
  %1758 = vmatpush.msra.mxu0 0.0
  %1759 = vmatpush.msra.mxu0 0.0
  %1760 = vmatpush.msra.mxu0 %v1740
  %1761 = vmatpush.msra.mxu0 %v1739
  %1762 = vmatpush.msra.mxu0 %v1738
  %1763 = vmatpush.msra.mxu0 %v1737
  %1764 = vmatmul.f32.gmra.mxu0 %v1746
  %v1765 = vpop.f32.mrf.mxu0
  %v1766 = vadd.f32 %v1743, %v1765
  %1767 = vdwg.mxu0
  %1769 = vrot.lane.b32.xlu0 %v1766, 1
  %v1770 = vpop.permute.xlu0 %1769
  %v1772 = vsub.f32 %v1766, %v1770
  %v1773 = vxor.u32 %v1772, 2147483648
  %v1774 = vmul.f32 %v1773, 1.442695
  %v1775 = vpow.pop %v1774
  %v1776 = vadd.f32 %v1775, 1.0
  %v1777 = vrcp.pop %v1776
  %v1778 = vmul.f32 %v1776, %v1777
  %v1779 = vsub.f32 1.0, %v1778
  %v1780 = vmul.f32 %v1777, %v1779
  %v1781 = vadd.f32 %v1777, %v1780
  %vm1782 = vweird.f32 %v1776
  %vm1783 = vweird.f32 %v1777
  %vm1784 = vmor %vm1782, %vm1783
  %v1785 = vsel %vm1784, %v1777, %v1781
  %v1786 = vand.u32 2147483647, %v1776
  %vm1787 = vcmp.eq.f32.partialorder %v1786, 8.507059e+37
  %v1788 = vand.u32 %v1776, 2147483648
  %v1789 = vor.u32 1.1754944e-38, %v1788
  %v1790 = vsel %vm1787, %v1789, %v1785
  %v1791 = vmul.f32 1.0, %v1790
  %v1792 = vsub.f32 1.0, %v1791
  %1794 = vrot.lane.b32.xlu0 %v1792, 127
  %v1795 = vpop.permute.xlu0 %1794
  %vm1797 = vcmask 7168
  %v1798 = vsel %vm1797, %v1795, %v1791
  %v1799 = vsub.f32 %v1798, 0.5
  %v1800 = vmul.f32 %v1799, 1.2
  %v1801 = vadd.f32 %v1800, 0.5
  %v1802 = vmax.f32 %v1801, 0.0
  %v1803 = vmin.f32 %v1802, 1.0
  %vm1804 = vcmask 15360
  %1805 = vst.msk [vmem:[%s13] sm:$0xff] %vm1804, %v1803
  // Predicated region
  $region54: #{forward.1} parent=0 // pred_check
    _
  $region55: #{forward.1} parent=0 // pred_check_branch
    %1807 = sbr.rel (0) target = $region57
  $region56: #{forward.1} parent=0 // pred_region
    _
  $region57: #{forward.1} parent=0 // pred_fallthru
    _
  // Predicated region
  $region58: #{forward.1} parent=0 // pred_check
    _
  $region59: #{forward.1} parent=0 // pred_check_branch
    %1809 = sbr.rel (0) target = $region61
  $region60: #{forward.1} parent=0 // pred_region
    _
  $region61: #{forward.1} parent=0 // pred_fallthru
    _

</llo_original>
